<compile_context>
chip_gen: v5e
topology: v5e:2x2
jax: 0.10.0
libtpu: 0.0.40
codegen_flags: <defaults>
</compile_context>

<pallas_src>
import jax
import jax.numpy as jnp
from jax.experimental import pallas as pl
from jax.experimental.pallas import tpu as pltpu


def _round_up(x: int, m: int) -> int:
    return (x + m - 1) // m * m


def _ffn_kernel(x_ref, w1_ref, b1_ref, w2_ref, b2_ref, o_ref, acc_ref):
    """One (M-tile, H-tile) step of  out = GELU(x @ W1 + b1) @ W2 + b2."""
    h_idx = pl.program_id(1)

    @pl.when(h_idx == 0)
    def _init():
        acc_ref[...] = jnp.zeros_like(acc_ref)

    # First projection on the MXU: bf16 x bf16 -> f32.
    h = jnp.dot(x_ref[...], w1_ref[...], preferred_element_type=jnp.float32)
    h = h + b1_ref[...]                       # per-H-tile bias, before GELU

    # tanh-approx GELU: transcendental goes to the EUP slot.
    h = jax.nn.gelu(h, approximate=True)

    # Second projection: cast activation back to the weight dtype so the MXU
    # stays on the fast bf16 path; accumulate in f32 across H tiles.
    acc_ref[...] += jnp.dot(
        h.astype(w2_ref.dtype), w2_ref[...], preferred_element_type=jnp.float32
    )

    @pl.when(h_idx == pl.num_programs(1) - 1)
    def _finalize():
        o_ref[...] = (acc_ref[...] + b2_ref[...]).astype(o_ref.dtype)


def feedforward_pallas(x, w1, b1, w2, b2, *, tm=256, th=512,
                       compute_dtype=jnp.bfloat16):
    """x: [B, S, D].  w1: [D, H], b1: [H], w2: [H, D], b2: [D].  Returns [B, S, D]."""
    B, S, D = x.shape
    Din, H = w1.shape
    assert Din == D and w2.shape == (H, D) and b1.shape == (H,) and b2.shape == (D,)
    M = B * S
    out_dtype = x.dtype

    # ---- lane/sublane-aligned padding and tile sizing ----------------------
    Dp = _round_up(D, 128)
    Hp = _round_up(H, 128)
    Mp = _round_up(M, 8)
    tm_eff = min(tm, Mp)
    Mp = _round_up(Mp, tm_eff)
    th_eff = min(th, Hp)
    Hp = _round_up(Hp, th_eff)

    x_p = jnp.pad(x.reshape(M, D), ((0, Mp - M), (0, Dp - D))).astype(compute_dtype)
    w1_p = jnp.pad(w1, ((0, Dp - D), (0, Hp - H))).astype(compute_dtype)
    w2_p = jnp.pad(w2, ((0, Hp - H), (0, Dp - D))).astype(compute_dtype)
    b1_p = jnp.pad(b1.astype(jnp.float32), (0, Hp - H)).reshape(1, Hp)
    b2_p = jnp.pad(b2.astype(jnp.float32), (0, Dp - D)).reshape(1, Dp)

    grid = (Mp // tm_eff, Hp // th_eff)

    in_bytes = jnp.dtype(compute_dtype).itemsize
    out_bytes = jnp.dtype(out_dtype).itemsize
    # Double-buffered tiles + f32 accumulator scratch + biases.
    est = (2 * tm_eff * Dp * in_bytes          # x tile
           + 2 * Dp * th_eff * in_bytes        # W1 column tile
           + 2 * th_eff * Dp * in_bytes        # W2 row tile
           + 2 * tm_eff * Dp * out_bytes       # output tile
           + tm_eff * Dp * 4                   # f32 accumulator
           + 2 * (Hp + Dp) * 4)                # biases (f32)
    # Cap well inside physical VMEM on every chip (v7x has 64 MiB per TC).
    vmem_limit = int(min(max(2 * est, 32 * 1024 * 1024), 48 * 1024 * 1024))

    cost = pl.CostEstimate(
        flops=4 * Mp * Dp * Hp,                # two matmuls, 2*M*N*K each
        transcendentals=Mp * Hp,               # one tanh per hidden activation
        bytes_accessed=(x_p.size * in_bytes + w1_p.size * in_bytes
                        + w2_p.size * in_bytes + (Hp + Dp) * 4
                        + Mp * Dp * out_bytes),
    )

    out_p = pl.pallas_call(
        _ffn_kernel,
        out_shape=jax.ShapeDtypeStruct((Mp, Dp), out_dtype),
        grid_spec=pltpu.PrefetchScalarGridSpec(
            num_scalar_prefetch=0,
            grid=grid,
            in_specs=[
                pl.BlockSpec((tm_eff, Dp), lambda i, h: (i, 0)),   # x (const in H)
                pl.BlockSpec((Dp, th_eff), lambda i, h: (0, h)),   # W1 col-tile
                pl.BlockSpec((1, th_eff), lambda i, h: (0, h)),    # b1 tile
                pl.BlockSpec((th_eff, Dp), lambda i, h: (h, 0)),   # W2 row-tile
                pl.BlockSpec((1, Dp), lambda i, h: (0, 0)),        # b2 (fetched once)
            ],
            out_specs=pl.BlockSpec((tm_eff, Dp), lambda i, h: (i, 0)),
            scratch_shapes=[pltpu.VMEM((tm_eff, Dp), jnp.float32)],
        ),
        compiler_params=pltpu.CompilerParams(
            dimension_semantics=("parallel", "arbitrary"),
            vmem_limit_bytes=vmem_limit,
        ),
        cost_estimate=cost,
    )(x_p, w1_p, b1_p, w2_p, b2_p)

    return out_p[:M, :D].reshape(B, S, D)


def feedforward_ref(x, w1, b1, w2, b2):
    """Pure-f32 reference: exact erf GELU (torch.nn.GELU default)."""
    h = jnp.dot(x, w1) + b1
    h = 0.5 * h * (1.0 + jax.lax.erf(h / jnp.sqrt(2.0)))
    return jnp.dot(h, w2) + b2


if __name__ == "__main__":
    # Small shapes consistent with the interface: embedding_dim=128, hidden=4*128.
    batch, seq, embedding_dim = 2, 64, 128
    hidden_dim = 4 * embedding_dim

    key = jax.random.PRNGKey(0)
    kx, k1, k2, k3, k4 = jax.random.split(key, 5)

    x = jax.random.normal(kx, (batch, seq, embedding_dim), dtype=jnp.float32)
    w1 = jax.random.normal(k1, (embedding_dim, hidden_dim), dtype=jnp.float32) * 0.02
    b1 = jax.random.normal(k2, (hidden_dim,), dtype=jnp.float32) * 0.02
    w2 = jax.random.normal(k3, (hidden_dim, embedding_dim), dtype=jnp.float32) * 0.02
    b2 = jax.random.normal(k4, (embedding_dim,), dtype=jnp.float32) * 0.02

    ref = feedforward_ref(x, w1, b1, w2, b2)

    # Default (large) tiles: single block per axis at these small shapes.
    out = jax.block_until_ready(feedforward_pallas(x, w1, b1, w2, b2))
    assert out.shape == (batch, seq, embedding_dim)
    assert jnp.allclose(out, ref, atol=2e-2, rtol=2e-2), "mismatch (default tiles)"

    # Small tiles: exercises the multi-M-tile / multi-H-tile accumulation path.
    out_t = jax.block_until_ready(
        feedforward_pallas(x, w1, b1, w2, b2, tm=64, th=128))
    assert jnp.allclose(out_t, ref, atol=2e-2, rtol=2e-2), "mismatch (tiled path)"

    print("KERNEL_OK")
</pallas_src>

<mosaic_0001>
module attributes {stable_mosaic.version = 11 : i64} {
  func.func @_ffn_kernel(%arg0: i32, %arg1: i32, %arg2: memref<128x128xbf16, #tpu.memory_space<vmem>>, %arg3: memref<128x512xbf16, #tpu.memory_space<vmem>>, %arg4: memref<1x512xf32, #tpu.memory_space<vmem>>, %arg5: memref<512x128xbf16, #tpu.memory_space<vmem>>, %arg6: memref<1x128xf32, #tpu.memory_space<vmem>>, %arg7: memref<128x128xf32, #tpu.memory_space<vmem>>, %arg8: memref<128x128xf32, #tpu.memory_space<vmem>>) attributes {dimension_semantics = [#tpu.dimension_semantics<parallel>, #tpu.dimension_semantics<arbitrary>], iteration_bounds = array<i64: 1, 1>, scalar_prefetch = 0 : i64, scratch_operands = 1 : i64, tpu.core_type = #tpu.core_type<tc>, window_params = [{transform_indices = @transform_0, window_bounds = array<i64: 128, 128>}, {transform_indices = @transform_1, window_bounds = array<i64: 128, 512>}, {transform_indices = @transform_2, window_bounds = array<i64: 1, 512>}, {transform_indices = @transform_3, window_bounds = array<i64: 512, 128>}, {pipeline_mode = #tpu.pipeline_mode<synchronous>, transform_indices = @transform_4, window_bounds = array<i64: 1, 128>}, {transform_indices = @transform_5, window_bounds = array<i64: 128, 128>}]} {
    %c0_i32 = arith.constant 0 : i32
    %0 = arith.cmpi eq, %arg1, %c0_i32 : i32
    %1 = arith.extui %0 : i1 to i32
    %c0_i32_0 = arith.constant 0 : i32
    %2 = arith.cmpi ne, %1, %c0_i32_0 : i32
    scf.if %2 {
      %cst_19 = arith.constant 0.000000e+00 : f32
      %31 = vector.broadcast %cst_19 : f32 to vector<128x128xf32>
      %c0_20 = arith.constant 0 : index
      %c0_21 = arith.constant 0 : index
      %32 = vector.load %arg8[%c0_20, %c0_21] : memref<128x128xf32, #tpu.memory_space<vmem>>, vector<128x128xf32>
      tpu.vector_store %arg8[%c0_20, %c0_21], %31 {strides = array<i32>} : memref<128x128xf32, #tpu.memory_space<vmem>>, vector<128x128xf32>,
    } else {
    }
    %c0 = arith.constant 0 : index
    %c0_1 = arith.constant 0 : index
    %3 = vector.load %arg2[%c0, %c0_1] : memref<128x128xbf16, #tpu.memory_space<vmem>>, vector<128x128xbf16>
    %c0_2 = arith.constant 0 : index
    %c0_3 = arith.constant 0 : index
    %4 = vector.load %arg3[%c0_2, %c0_3] : memref<128x512xbf16, #tpu.memory_space<vmem>>, vector<128x512xbf16>
    %cst = arith.constant dense<0.000000e+00> : vector<128x512xf32>
    %5 = tpu.matmul %3, %4, %cst {dimension_numbers = #tpu.dot_dimension_numbers<[1], [0], [0], [1], [0, 0, 1, 1], [], []>} : vector<128x128xbf16>, vector<128x512xbf16>, vector<128x512xf32> -> vector<128x512xf32>
    %c0_4 = arith.constant 0 : index
    %c0_5 = arith.constant 0 : index
    %6 = vector.load %arg4[%c0_4, %c0_5] : memref<1x512xf32, #tpu.memory_space<vmem>>, vector<1x512xf32>
    %7 = vector.broadcast %6 : vector<1x512xf32> to vector<128x512xf32>
    %8 = arith.addf %5, %7 : vector<128x512xf32>
    %9 = arith.mulf %8, %8 : vector<128x512xf32>
    %10 = arith.mulf %8, %9 : vector<128x512xf32>
    %cst_6 = arith.constant 4.471500e-02 : f32
    %11 = vector.broadcast %cst_6 : f32 to vector<128x512xf32>
    %12 = arith.mulf %11, %10 : vector<128x512xf32>
    %13 = arith.addf %8, %12 : vector<128x512xf32>
    %cst_7 = arith.constant 0.797884583 : f32
    %14 = vector.broadcast %cst_7 : f32 to vector<128x512xf32>
    %15 = arith.mulf %14, %13 : vector<128x512xf32>
    %16 = math.tanh %15 : vector<128x512xf32>
    %cst_8 = arith.constant 1.000000e+00 : f32
    %17 = vector.broadcast %cst_8 : f32 to vector<128x512xf32>
    %18 = arith.addf %17, %16 : vector<128x512xf32>
    %cst_9 = arith.constant 5.000000e-01 : f32
    %19 = vector.broadcast %cst_9 : f32 to vector<128x512xf32>
    %20 = arith.mulf %19, %18 : vector<128x512xf32>
    %21 = arith.mulf %8, %20 : vector<128x512xf32>
    %c0_10 = arith.constant 0 : index
    %c0_11 = arith.constant 0 : index
    %22 = vector.load %arg8[%c0_10, %c0_11] : memref<128x128xf32, #tpu.memory_space<vmem>>, vector<128x128xf32>
    %23 = arith.truncf %21 : vector<128x512xf32> to vector<128x512xbf16>
    %c0_12 = arith.constant 0 : index
    %c0_13 = arith.constant 0 : index
    %24 = vector.load %arg5[%c0_12, %c0_13] : memref<512x128xbf16, #tpu.memory_space<vmem>>, vector<512x128xbf16>
    %cst_14 = arith.constant dense<0.000000e+00> : vector<128x128xf32>
    %25 = tpu.matmul %23, %24, %cst_14 {dimension_numbers = #tpu.dot_dimension_numbers<[1], [0], [0], [1], [0, 0, 1, 1], [], []>} : vector<128x512xbf16>, vector<512x128xbf16>, vector<128x128xf32> -> vector<128x128xf32>
    %26 = arith.addf %22, %25 : vector<128x128xf32>
    %c0_15 = arith.constant 0 : index
    %c0_16 = arith.constant 0 : index
    %27 = vector.load %arg8[%c0_15, %c0_16] : memref<128x128xf32, #tpu.memory_space<vmem>>, vector<128x128xf32>
    tpu.vector_store %arg8[%c0_15, %c0_16], %26 {strides = array<i32>} : memref<128x128xf32, #tpu.memory_space<vmem>>, vector<128x128xf32>,
    %c0_i32_17 = arith.constant 0 : i32
    %28 = arith.cmpi eq, %arg1, %c0_i32_17 : i32
    %29 = arith.extui %28 : i1 to i32
    %c0_i32_18 = arith.constant 0 : i32
    %30 = arith.cmpi ne, %29, %c0_i32_18 : i32
    scf.if %30 {
      %c0_19 = arith.constant 0 : index
      %c0_20 = arith.constant 0 : index
      %31 = vector.load %arg8[%c0_19, %c0_20] : memref<128x128xf32, #tpu.memory_space<vmem>>, vector<128x128xf32>
      %c0_21 = arith.constant 0 : index
      %c0_22 = arith.constant 0 : index
      %32 = vector.load %arg6[%c0_21, %c0_22] : memref<1x128xf32, #tpu.memory_space<vmem>>, vector<1x128xf32>
      %33 = vector.broadcast %32 : vector<1x128xf32> to vector<128x128xf32>
      %34 = arith.addf %31, %33 : vector<128x128xf32>
      %c0_23 = arith.constant 0 : index
      %c0_24 = arith.constant 0 : index
      %35 = vector.load %arg7[%c0_23, %c0_24] : memref<128x128xf32, #tpu.memory_space<vmem>>, vector<128x128xf32>
      tpu.vector_store %arg7[%c0_23, %c0_24], %34 {strides = array<i32>} : memref<128x128xf32, #tpu.memory_space<vmem>>, vector<128x128xf32>,
    } else {
    }
    return
  }
  func.func @transform_0(%arg0: i32, %arg1: i32) -> (i32, i32) {
    %c0_i32 = arith.constant 0 : i32
    %c0_i32_0 = arith.constant 0 : i32
    return %arg0, %c0_i32 : i32, i32
  }
  func.func @transform_1(%arg0: i32, %arg1: i32) -> (i32, i32) {
    %c0_i32 = arith.constant 0 : i32
    %c0_i32_0 = arith.constant 0 : i32
    return %c0_i32, %arg1 : i32, i32
  }
  func.func @transform_2(%arg0: i32, %arg1: i32) -> (i32, i32) {
    %c0_i32 = arith.constant 0 : i32
    %c0_i32_0 = arith.constant 0 : i32
    return %c0_i32, %arg1 : i32, i32
  }
  func.func @transform_3(%arg0: i32, %arg1: i32) -> (i32, i32) {
    %c0_i32 = arith.constant 0 : i32
    %c0_i32_0 = arith.constant 0 : i32
    return %arg1, %c0_i32 : i32, i32
  }
  func.func @transform_4(%arg0: i32, %arg1: i32) -> (i32, i32) {
    %c0_i32 = arith.constant 0 : i32
    %c0_i32_0 = arith.constant 0 : i32
    %c0_i32_1 = arith.constant 0 : i32
    return %c0_i32, %c0_i32_0 : i32, i32
  }
  func.func @transform_5(%arg0: i32, %arg1: i32) -> (i32, i32) {
    %c0_i32 = arith.constant 0 : i32
    %c0_i32_0 = arith.constant 0 : i32
    return %arg0, %c0_i32 : i32, i32
  }
}

</mosaic_0001>

<llo_original>
// kernel: tpu_custom_call.1
$region0: #{tpu_custom_call.1}
  #allocation0 [shape = 'u32[]', space=smem, size = 0x4, offset = 0x4, fixed_abs, tag = 'smem constant byte address 0x4 - core index']
  #allocation1 [shape = 'u32[72,128]{1,0:T(1,128)}', space=vmem, size = 0x9000, scoped, tag = 'internal scratch']
  #allocation2 [shape = 'f32[128,128]{1,0:T(8,128)}', space=vmem, size = 0x10000, scoped, tag = 'scratch operand']
  %s0 = inlined_call_operand.hbm [shape: bf16[128,128], index: 0, kind: input, shape index: {}]
  %s1 = inlined_call_operand.hbm [shape: bf16[128,512], index: 1, kind: input, shape index: {}]
  %s2 = inlined_call_operand.hbm [shape: f32[1,512], index: 2, kind: input, shape index: {}]
  %s3 = inlined_call_operand.hbm [shape: bf16[512,128], index: 3, kind: input, shape index: {}]
  %s4 = inlined_call_operand.vmem [shape: f32[1,128], index: 4, kind: input, shape index: {}]
  %s5 = inlined_call_operand.hbm [shape: f32[128,128], index: 5, kind: output, shape index: {}]
  %s6 = sld [smem:[#allocation0]]
  $region54: #{tpu_custom_call.1} parent=0
    _
  %s8 = ssub.s32 1, %s6
  %s9 = scalar_select 0, %s8, %s6
  $region1: #{tpu_custom_call.1} parent=0
    #allocation3 [shape = 'u8[32768]{0}', space=vmem, size = 0x8000, scoped, tag = 'input window, operand 0, single buffered']
    #allocation4 [shape = 's32[1]{0}', space=sflag, size = 0x4, scoped, tag = 'scoped memory for tpu_custom_call.1']
    #allocation5 [shape = 's32[1]{0}', space=sflag, size = 0x4, scoped, tag = 'scoped memory for tpu_custom_call.1']
    #allocation6 [shape = 'u8[131072]{0}', space=vmem, size = 0x20000, scoped, tag = 'input window, operand 1, single buffered']
    #allocation7 [shape = 's32[1]{0}', space=sflag, size = 0x4, scoped, tag = 'scoped memory for tpu_custom_call.1']
    #allocation8 [shape = 'u8[2048]{0}', space=vmem, size = 0x800, scoped, tag = 'input window, operand 2, single buffered']
    #allocation9 [shape = 'u8[131072]{0}', space=vmem, size = 0x20000, scoped, tag = 'input window, operand 3, single buffered']
    #allocation10 [shape = 's32[1]{0}', space=sflag, size = 0x4, scoped, tag = 'scoped memory for tpu_custom_call.1']
    #allocation11 [shape = 'u8[65536]{0}', space=vmem, size = 0x10000, scoped, tag = 'output window, operand 0, single buffered']
    %10 = vsyncpa [#allocation4], 0
    %11 = vsyncpa [#allocation7], 0
    %12 = vsyncpa [#allocation10], 0
    %13 = vsyncpa [#allocation5], 0
    // Predicated region
    $region2: #{tpu_custom_call.1} parent=1 // pred_check
      _
    $region3: #{tpu_custom_call.1} parent=1 // pred_check_branch
      %15 = sbr.rel (0) target = $region5
    $region4: #{tpu_custom_call.1} parent=1 // pred_region
      %17 = vsyncadd [#allocation4], 0
      %s18 = sshll.u32 %s0, 4
      %s19 = int_to_ptr.hbm [resolvable:$true] %s18
      %s20 = sshll.u32 [#allocation3], 4
      %s21 = int_to_ptr.vmem [resolvable:$true] %s20
      %26 = dma.hbm_to_vmem [thread:$0]  %s19, 1024, %s21, [#allocation4], 64, 64, 4
    $region5: #{tpu_custom_call.1} parent=1 // pred_fallthru
      _
    // Predicated region
    $region6: #{tpu_custom_call.1} parent=1 // pred_check
      _
    $region7: #{tpu_custom_call.1} parent=1 // pred_check_branch
      %28 = sbr.rel (0) target = $region9
    $region8: #{tpu_custom_call.1} parent=1 // pred_region
      %30 = vsyncadd [#allocation7], 0
      %s31 = sshll.u32 %s1, 4
      %s32 = int_to_ptr.hbm [resolvable:$true] %s31
      %s33 = sshll.u32 [#allocation6], 4
      %s34 = int_to_ptr.vmem [resolvable:$true] %s33
      %39 = dma.hbm_to_vmem [thread:$0]  %s32, 4096, %s34, [#allocation7], 256, 256, 16
    $region9: #{tpu_custom_call.1} parent=1 // pred_fallthru
      _
    // Predicated region
    $region10: #{tpu_custom_call.1} parent=1 // pred_check
      _
    $region11: #{tpu_custom_call.1} parent=1 // pred_check_branch
      %41 = sbr.rel (0) target = $region13
    $region12: #{tpu_custom_call.1} parent=1 // pred_region
      %43 = vsyncadd [#allocation7], 0
      %s45 = sshll.u32 %s2, 4
      %s46 = int_to_ptr.hbm [resolvable:$true] %s45
      %s47 = sshll.u32 [#allocation8], 4
      %s48 = int_to_ptr.vmem [resolvable:$true] %s47
      %50 = dma.hbm_to_vmem [thread:$0]  %s46, 64, %s48, [#allocation7]
    $region13: #{tpu_custom_call.1} parent=1 // pred_fallthru
      _
    // Predicated region
    $region14: #{tpu_custom_call.1} parent=1 // pred_check
      _
    $region15: #{tpu_custom_call.1} parent=1 // pred_check_branch
      %52 = sbr.rel (0) target = $region17
    $region16: #{tpu_custom_call.1} parent=1 // pred_region
      %54 = vsyncadd [#allocation10], 0
      %s55 = sshll.u32 %s3, 4
      %s56 = int_to_ptr.hbm [resolvable:$true] %s55
      %s57 = sshll.u32 [#allocation9], 4
      %s58 = int_to_ptr.vmem [resolvable:$true] %s57
      %63 = dma.hbm_to_vmem [thread:$0]  %s56, 4096, %s58, [#allocation10], 64, 64, 4
    $region17: #{tpu_custom_call.1} parent=1 // pred_fallthru
      _
    // Predicated region
    $region18: #{tpu_custom_call.1} parent=1 // pred_check
      _
    $region19: #{tpu_custom_call.1} parent=1 // pred_check_branch
      %65 = sbr.rel (0) target = $region21
    $region20: #{tpu_custom_call.1} parent=1 // pred_region
      _
    $region21: #{tpu_custom_call.1} parent=1 // pred_fallthru
      _
    // Predicated region
    $region22: #{tpu_custom_call.1} parent=1 // pred_check
      _
    $region23: #{tpu_custom_call.1} parent=1 // pred_check_branch
      %67 = sbr.rel (0) target = $region25
    $region24: #{tpu_custom_call.1} parent=1 // pred_region
      %69 = dma.done [#allocation4], 1024
    $region25: #{tpu_custom_call.1} parent=1 // pred_fallthru
      _
    // Predicated region
    $region26: #{tpu_custom_call.1} parent=1 // pred_check
      _
    $region27: #{tpu_custom_call.1} parent=1 // pred_check_branch
      %71 = sbr.rel (0) target = $region29
    $region28: #{tpu_custom_call.1} parent=1 // pred_region
      %73 = dma.done [#allocation7], 4096
    $region29: #{tpu_custom_call.1} parent=1 // pred_fallthru
      _
    // Predicated region
    $region30: #{tpu_custom_call.1} parent=1 // pred_check
      _
    $region31: #{tpu_custom_call.1} parent=1 // pred_check_branch
      %75 = sbr.rel (0) target = $region33
    $region32: #{tpu_custom_call.1} parent=1 // pred_region
      %77 = dma.done [#allocation7], 64
    $region33: #{tpu_custom_call.1} parent=1 // pred_fallthru
      _
    // Predicated region
    $region34: #{tpu_custom_call.1} parent=1 // pred_check
      _
    $region35: #{tpu_custom_call.1} parent=1 // pred_check_branch
      %79 = sbr.rel (0) target = $region37
    $region36: #{tpu_custom_call.1} parent=1 // pred_region
      %81 = dma.done [#allocation10], 4096
    $region37: #{tpu_custom_call.1} parent=1 // pred_fallthru
      _
    %p82 = scmp.eq.s32.totalorder 0, 0
    // Predicated region
    $region38: #{tpu_custom_call.1} parent=1 // pred_check
      %p83 = pneg %p82
    $region39: #{tpu_custom_call.1} parent=1 // pred_check_branch
      %85 = sbr.rel (%p83) target = $region41
    $region40: #{tpu_custom_call.1} parent=1 // pred_region
      %86 = vst [vmem:[#allocation2] sm:$0xff] 0.0
      %87 = vst [vmem:[#allocation2 + $0x8] sm:$0xff] 0.0
      %88 = vst [vmem:[#allocation2 + $0x10] sm:$0xff] 0.0
      %89 = vst [vmem:[#allocation2 + $0x18] sm:$0xff] 0.0
      %90 = vst [vmem:[#allocation2 + $0x20] sm:$0xff] 0.0
      %91 = vst [vmem:[#allocation2 + $0x28] sm:$0xff] 0.0
      %92 = vst [vmem:[#allocation2 + $0x30] sm:$0xff] 0.0
      %93 = vst [vmem:[#allocation2 + $0x38] sm:$0xff] 0.0
      %94 = vst [vmem:[#allocation2 + $0x40] sm:$0xff] 0.0
      %95 = vst [vmem:[#allocation2 + $0x48] sm:$0xff] 0.0
      %96 = vst [vmem:[#allocation2 + $0x50] sm:$0xff] 0.0
      %97 = vst [vmem:[#allocation2 + $0x58] sm:$0xff] 0.0
      %98 = vst [vmem:[#allocation2 + $0x60] sm:$0xff] 0.0
      %99 = vst [vmem:[#allocation2 + $0x68] sm:$0xff] 0.0
      %100 = vst [vmem:[#allocation2 + $0x70] sm:$0xff] 0.0
      %101 = vst [vmem:[#allocation2 + $0x78] sm:$0xff] 0.0
    $region41: #{tpu_custom_call.1} parent=1 // pred_fallthru
      _
    %v102 = vld [vmem:[#allocation3] sm:$0xf]
    %v103 = vld [vmem:[#allocation3 + $0x4] sm:$0xf]
    %v104 = vld [vmem:[#allocation3 + $0x8] sm:$0xf]
    %v105 = vld [vmem:[#allocation3 + $0xc] sm:$0xf]
    %v106 = vld [vmem:[#allocation3 + $0x10] sm:$0xf]
    %v107 = vld [vmem:[#allocation3 + $0x14] sm:$0xf]
    %v108 = vld [vmem:[#allocation3 + $0x18] sm:$0xf]
    %v109 = vld [vmem:[#allocation3 + $0x1c] sm:$0xf]
    %v110 = vld [vmem:[#allocation3 + $0x20] sm:$0xf]
    %v111 = vld [vmem:[#allocation3 + $0x24] sm:$0xf]
    %v112 = vld [vmem:[#allocation3 + $0x28] sm:$0xf]
    %v113 = vld [vmem:[#allocation3 + $0x2c] sm:$0xf]
    %v114 = vld [vmem:[#allocation3 + $0x30] sm:$0xf]
    %v115 = vld [vmem:[#allocation3 + $0x34] sm:$0xf]
    %v116 = vld [vmem:[#allocation3 + $0x38] sm:$0xf]
    %v117 = vld [vmem:[#allocation3 + $0x3c] sm:$0xf]
    %v118 = vld [vmem:[#allocation6] sm:$0xff]
    %v119 = vld [vmem:[#allocation6 + $0x8] sm:$0xff]
    %v120 = vld [vmem:[#allocation6 + $0x10] sm:$0xff]
    %v121 = vld [vmem:[#allocation6 + $0x18] sm:$0xff]
    %v122 = vld [vmem:[#allocation6 + $0x20] sm:$0xff]
    %v123 = vld [vmem:[#allocation6 + $0x28] sm:$0xff]
    %v124 = vld [vmem:[#allocation6 + $0x30] sm:$0xff]
    %v125 = vld [vmem:[#allocation6 + $0x38] sm:$0xff]
    %v126 = vld [vmem:[#allocation6 + $0x40] sm:$0xff]
    %v127 = vld [vmem:[#allocation6 + $0x48] sm:$0xff]
    %v128 = vld [vmem:[#allocation6 + $0x50] sm:$0xff]
    %v129 = vld [vmem:[#allocation6 + $0x58] sm:$0xff]
    %v130 = vld [vmem:[#allocation6 + $0x60] sm:$0xff]
    %v131 = vld [vmem:[#allocation6 + $0x68] sm:$0xff]
    %v132 = vld [vmem:[#allocation6 + $0x70] sm:$0xff]
    %v133 = vld [vmem:[#allocation6 + $0x78] sm:$0xff]
    %v134 = vld [vmem:[#allocation6 + $0x80] sm:$0xff]
    %v135 = vld [vmem:[#allocation6 + $0x88] sm:$0xff]
    %v136 = vld [vmem:[#allocation6 + $0x90] sm:$0xff]
    %v137 = vld [vmem:[#allocation6 + $0x98] sm:$0xff]
    %v138 = vld [vmem:[#allocation6 + $0xa0] sm:$0xff]
    %v139 = vld [vmem:[#allocation6 + $0xa8] sm:$0xff]
    %v140 = vld [vmem:[#allocation6 + $0xb0] sm:$0xff]
    %v141 = vld [vmem:[#allocation6 + $0xb8] sm:$0xff]
    %v142 = vld [vmem:[#allocation6 + $0xc0] sm:$0xff]
    %v143 = vld [vmem:[#allocation6 + $0xc8] sm:$0xff]
    %v144 = vld [vmem:[#allocation6 + $0xd0] sm:$0xff]
    %v145 = vld [vmem:[#allocation6 + $0xd8] sm:$0xff]
    %v146 = vld [vmem:[#allocation6 + $0xe0] sm:$0xff]
    %v147 = vld [vmem:[#allocation6 + $0xe8] sm:$0xff]
    %v148 = vld [vmem:[#allocation6 + $0xf0] sm:$0xff]
    %v149 = vld [vmem:[#allocation6 + $0xf8] sm:$0xff]
    %v150 = vld [vmem:[#allocation8] sm:$0xf]
    %v152 = vperm.slane %v150, 0
    %v153 = vperm.slane %v150, 1
    %v154 = vperm.slane %v150, 2
    %v155 = vperm.slane %v150, 3
    %v176 = vunpack.c.l.b16 %v102
    %v177 = vunpack.c.l.b16 %v103
    %v178 = vunpack.c.l.b16 %v104
    %v179 = vunpack.c.l.b16 %v105
    %v180 = vunpack.c.l.b16 %v106
    %v181 = vunpack.c.l.b16 %v107
    %v182 = vunpack.c.l.b16 %v108
    %v183 = vunpack.c.l.b16 %v109
    %v184 = vunpack.c.l.b16 %v110
    %v185 = vunpack.c.l.b16 %v111
    %v186 = vunpack.c.l.b16 %v112
    %v187 = vunpack.c.l.b16 %v113
    %v188 = vunpack.c.l.b16 %v114
    %v189 = vunpack.c.l.b16 %v115
    %v190 = vunpack.c.l.b16 %v116
    %v191 = vunpack.c.l.b16 %v117
    %v192 = vpack.c.b16 %v177, %v176
    %v193 = vpack.c.b16 %v179, %v178
    %v194 = vpack.c.b16 %v181, %v180
    %v195 = vpack.c.b16 %v183, %v182
    %v196 = vpack.c.b16 %v185, %v184
    %v197 = vpack.c.b16 %v187, %v186
    %v198 = vpack.c.b16 %v189, %v188
    %v199 = vpack.c.b16 %v191, %v190
    %v240 = vunpack.c.l.b16 %v118
    %v241 = vunpack.c.h.b16 %v118
    %v242 = vunpack.c.l.b16 %v119
    %v243 = vunpack.c.h.b16 %v119
    %v244 = vunpack.c.l.b16 %v120
    %v245 = vunpack.c.h.b16 %v120
    %v246 = vunpack.c.l.b16 %v121
    %v247 = vunpack.c.h.b16 %v121
    %v248 = vunpack.c.l.b16 %v122
    %v249 = vunpack.c.h.b16 %v122
    %v250 = vunpack.c.l.b16 %v123
    %v251 = vunpack.c.h.b16 %v123
    %v252 = vunpack.c.l.b16 %v124
    %v253 = vunpack.c.h.b16 %v124
    %v254 = vunpack.c.l.b16 %v125
    %v255 = vunpack.c.h.b16 %v125
    %v256 = vunpack.c.l.b16 %v126
    %v257 = vunpack.c.h.b16 %v126
    %v258 = vunpack.c.l.b16 %v127
    %v259 = vunpack.c.h.b16 %v127
    %v260 = vunpack.c.l.b16 %v128
    %v261 = vunpack.c.h.b16 %v128
    %v262 = vunpack.c.l.b16 %v129
    %v263 = vunpack.c.h.b16 %v129
    %v264 = vunpack.c.l.b16 %v130
    %v265 = vunpack.c.h.b16 %v130
    %v266 = vunpack.c.l.b16 %v131
    %v267 = vunpack.c.h.b16 %v131
    %v268 = vunpack.c.l.b16 %v132
    %v269 = vunpack.c.h.b16 %v132
    %v270 = vunpack.c.l.b16 %v133
    %v271 = vunpack.c.h.b16 %v133
    %v272 = vunpack.c.l.b16 %v134
    %v273 = vunpack.c.h.b16 %v134
    %v274 = vunpack.c.l.b16 %v135
    %v275 = vunpack.c.h.b16 %v135
    %v276 = vunpack.c.l.b16 %v136
    %v277 = vunpack.c.h.b16 %v136
    %v278 = vunpack.c.l.b16 %v137
    %v279 = vunpack.c.h.b16 %v137
    %v280 = vunpack.c.l.b16 %v138
    %v281 = vunpack.c.h.b16 %v138
    %v282 = vunpack.c.l.b16 %v139
    %v283 = vunpack.c.h.b16 %v139
    %v284 = vunpack.c.l.b16 %v140
    %v285 = vunpack.c.h.b16 %v140
    %v286 = vunpack.c.l.b16 %v141
    %v287 = vunpack.c.h.b16 %v141
    %v288 = vunpack.c.l.b16 %v142
    %v289 = vunpack.c.h.b16 %v142
    %v290 = vunpack.c.l.b16 %v143
    %v291 = vunpack.c.h.b16 %v143
    %v292 = vunpack.c.l.b16 %v144
    %v293 = vunpack.c.h.b16 %v144
    %v294 = vunpack.c.l.b16 %v145
    %v295 = vunpack.c.h.b16 %v145
    %v296 = vunpack.c.l.b16 %v146
    %v297 = vunpack.c.h.b16 %v146
    %v298 = vunpack.c.l.b16 %v147
    %v299 = vunpack.c.h.b16 %v147
    %v300 = vunpack.c.l.b16 %v148
    %v301 = vunpack.c.h.b16 %v148
    %v302 = vunpack.c.l.b16 %v149
    %v303 = vunpack.c.h.b16 %v149
    %v304 = vpack.c.b16 %v244, %v240
    %v305 = vpack.c.b16 %v245, %v241
    %v306 = vpack.c.b16 %v246, %v242
    %v307 = vpack.c.b16 %v247, %v243
    %v308 = vpack.c.b16 %v252, %v248
    %v309 = vpack.c.b16 %v253, %v249
    %v310 = vpack.c.b16 %v254, %v250
    %v311 = vpack.c.b16 %v255, %v251
    %v312 = vpack.c.b16 %v260, %v256
    %v313 = vpack.c.b16 %v261, %v257
    %v314 = vpack.c.b16 %v262, %v258
    %v315 = vpack.c.b16 %v263, %v259
    %v316 = vpack.c.b16 %v268, %v264
    %v317 = vpack.c.b16 %v269, %v265
    %v318 = vpack.c.b16 %v270, %v266
    %v319 = vpack.c.b16 %v271, %v267
    %v320 = vpack.c.b16 %v276, %v272
    %v321 = vpack.c.b16 %v277, %v273
    %v322 = vpack.c.b16 %v278, %v274
    %v323 = vpack.c.b16 %v279, %v275
    %v324 = vpack.c.b16 %v284, %v280
    %v325 = vpack.c.b16 %v285, %v281
    %v326 = vpack.c.b16 %v286, %v282
    %v327 = vpack.c.b16 %v287, %v283
    %v328 = vpack.c.b16 %v292, %v288
    %v329 = vpack.c.b16 %v293, %v289
    %v330 = vpack.c.b16 %v294, %v290
    %v331 = vpack.c.b16 %v295, %v291
    %v332 = vpack.c.b16 %v300, %v296
    %v333 = vpack.c.b16 %v301, %v297
    %v334 = vpack.c.b16 %v302, %v298
    %v335 = vpack.c.b16 %v303, %v299
    %368 = vmatpush.bf16.msra.mxu0 %v332
    %369 = vmatpush.bf16.msra.mxu0 %v328
    %370 = vmatpush.bf16.msra.mxu0 %v324
    %371 = vmatpush.bf16.msra.mxu0 %v320
    %372 = vmatpush.bf16.msra.mxu0 %v316
    %373 = vmatpush.bf16.msra.mxu0 %v312
    %374 = vmatpush.bf16.msra.mxu0 %v308
    %375 = vmatpush.bf16.msra.mxu0 %v304
    %376 = vmatmul.bf16.gmra.mxu0 %v192
    %v377 = vpop.f32.mrf.mxu0
    %v378 = vadd.f32 %v152, %v377
    %v379 = vpop.f32.mrf.mxu0
    %v380 = vadd.f32 %v152, %v379
    %381 = vmatmul.bf16.gmra.mxu0 %v193
    %v382 = vpop.f32.mrf.mxu0
    %v383 = vadd.f32 %v152, %v382
    %v384 = vpop.f32.mrf.mxu0
    %v385 = vadd.f32 %v152, %v384
    %386 = vmatmul.bf16.gmra.mxu0 %v194
    %v387 = vpop.f32.mrf.mxu0
    %v388 = vadd.f32 %v152, %v387
    %v389 = vpop.f32.mrf.mxu0
    %v390 = vadd.f32 %v152, %v389
    %391 = vmatmul.bf16.gmra.mxu0 %v195
    %v392 = vpop.f32.mrf.mxu0
    %v393 = vadd.f32 %v152, %v392
    %v394 = vpop.f32.mrf.mxu0
    %v395 = vadd.f32 %v152, %v394
    %396 = vmatmul.bf16.gmra.mxu0 %v196
    %v397 = vpop.f32.mrf.mxu0
    %v398 = vadd.f32 %v152, %v397
    %v399 = vpop.f32.mrf.mxu0
    %v400 = vadd.f32 %v152, %v399
    %401 = vmatmul.bf16.gmra.mxu0 %v197
    %v402 = vpop.f32.mrf.mxu0
    %v403 = vadd.f32 %v152, %v402
    %v404 = vpop.f32.mrf.mxu0
    %v405 = vadd.f32 %v152, %v404
    %406 = vmatmul.bf16.gmra.mxu0 %v198
    %v407 = vpop.f32.mrf.mxu0
    %v408 = vadd.f32 %v152, %v407
    %v409 = vpop.f32.mrf.mxu0
    %v410 = vadd.f32 %v152, %v409
    %411 = vmatmul.bf16.gmra.mxu0 %v199
    %v412 = vpop.f32.mrf.mxu0
    %v413 = vadd.f32 %v152, %v412
    %v414 = vpop.f32.mrf.mxu0
    %v415 = vadd.f32 %v152, %v414
    %416 = vdwg.mxu0
    %417 = vmatpush.bf16.msra.mxu0 %v333
    %418 = vmatpush.bf16.msra.mxu0 %v329
    %419 = vmatpush.bf16.msra.mxu0 %v325
    %420 = vmatpush.bf16.msra.mxu0 %v321
    %421 = vmatpush.bf16.msra.mxu0 %v317
    %422 = vmatpush.bf16.msra.mxu0 %v313
    %423 = vmatpush.bf16.msra.mxu0 %v309
    %424 = vmatpush.bf16.msra.mxu0 %v305
    %425 = vmatmul.bf16.gmra.mxu0 %v192
    %v426 = vpop.f32.mrf.mxu0
    %v427 = vadd.f32 %v153, %v426
    %v428 = vpop.f32.mrf.mxu0
    %v429 = vadd.f32 %v153, %v428
    %430 = vmatmul.bf16.gmra.mxu0 %v193
    %v431 = vpop.f32.mrf.mxu0
    %v432 = vadd.f32 %v153, %v431
    %v433 = vpop.f32.mrf.mxu0
    %v434 = vadd.f32 %v153, %v433
    %435 = vmatmul.bf16.gmra.mxu0 %v194
    %v436 = vpop.f32.mrf.mxu0
    %v437 = vadd.f32 %v153, %v436
    %v438 = vpop.f32.mrf.mxu0
    %v439 = vadd.f32 %v153, %v438
    %440 = vmatmul.bf16.gmra.mxu0 %v195
    %v441 = vpop.f32.mrf.mxu0
    %v442 = vadd.f32 %v153, %v441
    %v443 = vpop.f32.mrf.mxu0
    %v444 = vadd.f32 %v153, %v443
    %445 = vmatmul.bf16.gmra.mxu0 %v196
    %v446 = vpop.f32.mrf.mxu0
    %v447 = vadd.f32 %v153, %v446
    %v448 = vpop.f32.mrf.mxu0
    %v449 = vadd.f32 %v153, %v448
    %450 = vmatmul.bf16.gmra.mxu0 %v197
    %v451 = vpop.f32.mrf.mxu0
    %v452 = vadd.f32 %v153, %v451
    %v453 = vpop.f32.mrf.mxu0
    %v454 = vadd.f32 %v153, %v453
    %455 = vmatmul.bf16.gmra.mxu0 %v198
    %v456 = vpop.f32.mrf.mxu0
    %v457 = vadd.f32 %v153, %v456
    %v458 = vpop.f32.mrf.mxu0
    %v459 = vadd.f32 %v153, %v458
    %460 = vmatmul.bf16.gmra.mxu0 %v199
    %v461 = vpop.f32.mrf.mxu0
    %v462 = vadd.f32 %v153, %v461
    %v463 = vpop.f32.mrf.mxu0
    %v464 = vadd.f32 %v153, %v463
    %465 = vdwg.mxu0
    %466 = vmatpush.bf16.msra.mxu0 %v334
    %467 = vmatpush.bf16.msra.mxu0 %v330
    %468 = vmatpush.bf16.msra.mxu0 %v326
    %469 = vmatpush.bf16.msra.mxu0 %v322
    %470 = vmatpush.bf16.msra.mxu0 %v318
    %471 = vmatpush.bf16.msra.mxu0 %v314
    %472 = vmatpush.bf16.msra.mxu0 %v310
    %473 = vmatpush.bf16.msra.mxu0 %v306
    %474 = vmatmul.bf16.gmra.mxu0 %v192
    %v475 = vpop.f32.mrf.mxu0
    %v476 = vadd.f32 %v154, %v475
    %v477 = vpop.f32.mrf.mxu0
    %v478 = vadd.f32 %v154, %v477
    %479 = vmatmul.bf16.gmra.mxu0 %v193
    %v480 = vpop.f32.mrf.mxu0
    %v481 = vadd.f32 %v154, %v480
    %v482 = vpop.f32.mrf.mxu0
    %v483 = vadd.f32 %v154, %v482
    %484 = vmatmul.bf16.gmra.mxu0 %v194
    %v485 = vpop.f32.mrf.mxu0
    %v486 = vadd.f32 %v154, %v485
    %v487 = vpop.f32.mrf.mxu0
    %v488 = vadd.f32 %v154, %v487
    %489 = vmatmul.bf16.gmra.mxu0 %v195
    %v490 = vpop.f32.mrf.mxu0
    %v491 = vadd.f32 %v154, %v490
    %v492 = vpop.f32.mrf.mxu0
    %v493 = vadd.f32 %v154, %v492
    %494 = vmatmul.bf16.gmra.mxu0 %v196
    %v495 = vpop.f32.mrf.mxu0
    %v496 = vadd.f32 %v154, %v495
    %v497 = vpop.f32.mrf.mxu0
    %v498 = vadd.f32 %v154, %v497
    %499 = vmatmul.bf16.gmra.mxu0 %v197
    %v500 = vpop.f32.mrf.mxu0
    %v501 = vadd.f32 %v154, %v500
    %v502 = vpop.f32.mrf.mxu0
    %v503 = vadd.f32 %v154, %v502
    %504 = vmatmul.bf16.gmra.mxu0 %v198
    %v505 = vpop.f32.mrf.mxu0
    %v506 = vadd.f32 %v154, %v505
    %v507 = vpop.f32.mrf.mxu0
    %v508 = vadd.f32 %v154, %v507
    %509 = vmatmul.bf16.gmra.mxu0 %v199
    %v510 = vpop.f32.mrf.mxu0
    %v511 = vadd.f32 %v154, %v510
    %v512 = vpop.f32.mrf.mxu0
    %v513 = vadd.f32 %v154, %v512
    %514 = vdwg.mxu0
    %515 = vmatpush.bf16.msra.mxu0 %v335
    %516 = vmatpush.bf16.msra.mxu0 %v331
    %517 = vmatpush.bf16.msra.mxu0 %v327
    %518 = vmatpush.bf16.msra.mxu0 %v323
    %519 = vmatpush.bf16.msra.mxu0 %v319
    %520 = vmatpush.bf16.msra.mxu0 %v315
    %521 = vmatpush.bf16.msra.mxu0 %v311
    %522 = vmatpush.bf16.msra.mxu0 %v307
    %523 = vmatmul.bf16.gmra.mxu0 %v192
    %v524 = vpop.f32.mrf.mxu0
    %v525 = vadd.f32 %v155, %v524
    %v526 = vpop.f32.mrf.mxu0
    %v527 = vadd.f32 %v155, %v526
    %528 = vmatmul.bf16.gmra.mxu0 %v193
    %v529 = vpop.f32.mrf.mxu0
    %v530 = vadd.f32 %v155, %v529
    %v531 = vpop.f32.mrf.mxu0
    %v532 = vadd.f32 %v155, %v531
    %533 = vmatmul.bf16.gmra.mxu0 %v194
    %v534 = vpop.f32.mrf.mxu0
    %v535 = vadd.f32 %v155, %v534
    %v536 = vpop.f32.mrf.mxu0
    %v537 = vadd.f32 %v155, %v536
    %538 = vmatmul.bf16.gmra.mxu0 %v195
    %v539 = vpop.f32.mrf.mxu0
    %v540 = vadd.f32 %v155, %v539
    %v541 = vpop.f32.mrf.mxu0
    %v542 = vadd.f32 %v155, %v541
    %543 = vmatmul.bf16.gmra.mxu0 %v196
    %v544 = vpop.f32.mrf.mxu0
    %v545 = vadd.f32 %v155, %v544
    %v546 = vpop.f32.mrf.mxu0
    %v547 = vadd.f32 %v155, %v546
    %548 = vmatmul.bf16.gmra.mxu0 %v197
    %v549 = vpop.f32.mrf.mxu0
    %v550 = vadd.f32 %v155, %v549
    %v551 = vpop.f32.mrf.mxu0
    %v552 = vadd.f32 %v155, %v551
    %553 = vmatmul.bf16.gmra.mxu0 %v198
    %v554 = vpop.f32.mrf.mxu0
    %v555 = vadd.f32 %v155, %v554
    %v556 = vpop.f32.mrf.mxu0
    %v557 = vadd.f32 %v155, %v556
    %558 = vmatmul.bf16.gmra.mxu0 %v199
    %v559 = vpop.f32.mrf.mxu0
    %v560 = vadd.f32 %v155, %v559
    %v561 = vpop.f32.mrf.mxu0
    %v562 = vadd.f32 %v155, %v561
    %563 = vdwg.mxu0
    %v564 = vmul.f32 %v378, %v378
    %v565 = vmul.f32 %v427, %v427
    %v566 = vmul.f32 %v476, %v476
    %v567 = vmul.f32 %v525, %v525
    %v568 = vmul.f32 %v380, %v380
    %v569 = vmul.f32 %v429, %v429
    %v570 = vmul.f32 %v478, %v478
    %v571 = vmul.f32 %v527, %v527
    %v572 = vmul.f32 %v383, %v383
    %v573 = vmul.f32 %v432, %v432
    %v574 = vmul.f32 %v481, %v481
    %v575 = vmul.f32 %v530, %v530
    %v576 = vmul.f32 %v385, %v385
    %v577 = vmul.f32 %v434, %v434
    %v578 = vmul.f32 %v483, %v483
    %v579 = vmul.f32 %v532, %v532
    %v580 = vmul.f32 %v388, %v388
    %v581 = vmul.f32 %v437, %v437
    %v582 = vmul.f32 %v486, %v486
    %v583 = vmul.f32 %v535, %v535
    %v584 = vmul.f32 %v390, %v390
    %v585 = vmul.f32 %v439, %v439
    %v586 = vmul.f32 %v488, %v488
    %v587 = vmul.f32 %v537, %v537
    %v588 = vmul.f32 %v393, %v393
    %v589 = vmul.f32 %v442, %v442
    %v590 = vmul.f32 %v491, %v491
    %v591 = vmul.f32 %v540, %v540
    %v592 = vmul.f32 %v395, %v395
    %v593 = vmul.f32 %v444, %v444
    %v594 = vmul.f32 %v493, %v493
    %v595 = vmul.f32 %v542, %v542
    %v596 = vmul.f32 %v398, %v398
    %v597 = vmul.f32 %v447, %v447
    %v598 = vmul.f32 %v496, %v496
    %v599 = vmul.f32 %v545, %v545
    %v600 = vmul.f32 %v400, %v400
    %v601 = vmul.f32 %v449, %v449
    %v602 = vmul.f32 %v498, %v498
    %v603 = vmul.f32 %v547, %v547
    %v604 = vmul.f32 %v403, %v403
    %v605 = vmul.f32 %v452, %v452
    %v606 = vmul.f32 %v501, %v501
    %v607 = vmul.f32 %v550, %v550
    %v608 = vmul.f32 %v405, %v405
    %v609 = vmul.f32 %v454, %v454
    %v610 = vmul.f32 %v503, %v503
    %v611 = vmul.f32 %v552, %v552
    %v612 = vmul.f32 %v408, %v408
    %v613 = vmul.f32 %v457, %v457
    %v614 = vmul.f32 %v506, %v506
    %v615 = vmul.f32 %v555, %v555
    %v616 = vmul.f32 %v410, %v410
    %v617 = vmul.f32 %v459, %v459
    %v618 = vmul.f32 %v508, %v508
    %v619 = vmul.f32 %v557, %v557
    %v620 = vmul.f32 %v413, %v413
    %v621 = vmul.f32 %v462, %v462
    %v622 = vmul.f32 %v511, %v511
    %v623 = vmul.f32 %v560, %v560
    %v624 = vmul.f32 %v415, %v415
    %v625 = vmul.f32 %v464, %v464
    %v626 = vmul.f32 %v513, %v513
    %v627 = vmul.f32 %v562, %v562
    %v628 = vmul.f32 %v378, %v564
    %v629 = vmul.f32 %v427, %v565
    %v630 = vmul.f32 %v476, %v566
    %v631 = vmul.f32 %v525, %v567
    %v632 = vmul.f32 %v380, %v568
    %v633 = vmul.f32 %v429, %v569
    %v634 = vmul.f32 %v478, %v570
    %v635 = vmul.f32 %v527, %v571
    %v636 = vmul.f32 %v383, %v572
    %v637 = vmul.f32 %v432, %v573
    %v638 = vmul.f32 %v481, %v574
    %v639 = vmul.f32 %v530, %v575
    %v640 = vmul.f32 %v385, %v576
    %v641 = vmul.f32 %v434, %v577
    %v642 = vmul.f32 %v483, %v578
    %v643 = vmul.f32 %v532, %v579
    %v644 = vmul.f32 %v388, %v580
    %v645 = vmul.f32 %v437, %v581
    %v646 = vmul.f32 %v486, %v582
    %v647 = vmul.f32 %v535, %v583
    %v648 = vmul.f32 %v390, %v584
    %v649 = vmul.f32 %v439, %v585
    %v650 = vmul.f32 %v488, %v586
    %v651 = vmul.f32 %v537, %v587
    %v652 = vmul.f32 %v393, %v588
    %v653 = vmul.f32 %v442, %v589
    %v654 = vmul.f32 %v491, %v590
    %v655 = vmul.f32 %v540, %v591
    %v656 = vmul.f32 %v395, %v592
    %v657 = vmul.f32 %v444, %v593
    %v658 = vmul.f32 %v493, %v594
    %v659 = vmul.f32 %v542, %v595
    %v660 = vmul.f32 %v398, %v596
    %v661 = vmul.f32 %v447, %v597
    %v662 = vmul.f32 %v496, %v598
    %v663 = vmul.f32 %v545, %v599
    %v664 = vmul.f32 %v400, %v600
    %v665 = vmul.f32 %v449, %v601
    %v666 = vmul.f32 %v498, %v602
    %v667 = vmul.f32 %v547, %v603
    %v668 = vmul.f32 %v403, %v604
    %v669 = vmul.f32 %v452, %v605
    %v670 = vmul.f32 %v501, %v606
    %v671 = vmul.f32 %v550, %v607
    %v672 = vmul.f32 %v405, %v608
    %v673 = vmul.f32 %v454, %v609
    %v674 = vmul.f32 %v503, %v610
    %v675 = vmul.f32 %v552, %v611
    %v676 = vmul.f32 %v408, %v612
    %v677 = vmul.f32 %v457, %v613
    %v678 = vmul.f32 %v506, %v614
    %v679 = vmul.f32 %v555, %v615
    %v680 = vmul.f32 %v410, %v616
    %v681 = vmul.f32 %v459, %v617
    %v682 = vmul.f32 %v508, %v618
    %v683 = vmul.f32 %v557, %v619
    %v684 = vmul.f32 %v413, %v620
    %v685 = vmul.f32 %v462, %v621
    %v686 = vmul.f32 %v511, %v622
    %v687 = vmul.f32 %v560, %v623
    %v688 = vmul.f32 %v415, %v624
    %v689 = vmul.f32 %v464, %v625
    %v690 = vmul.f32 %v513, %v626
    %v691 = vmul.f32 %v562, %v627
    %v692 = vmul.f32 %v628, 0.044715
    %v693 = vmul.f32 %v629, 0.044715
    %v694 = vmul.f32 %v630, 0.044715
    %v695 = vmul.f32 %v631, 0.044715
    %v696 = vmul.f32 %v632, 0.044715
    %v697 = vmul.f32 %v633, 0.044715
    %v698 = vmul.f32 %v634, 0.044715
    %v699 = vmul.f32 %v635, 0.044715
    %v700 = vmul.f32 %v636, 0.044715
    %v701 = vmul.f32 %v637, 0.044715
    %v702 = vmul.f32 %v638, 0.044715
    %v703 = vmul.f32 %v639, 0.044715
    %v704 = vmul.f32 %v640, 0.044715
    %v705 = vmul.f32 %v641, 0.044715
    %v706 = vmul.f32 %v642, 0.044715
    %v707 = vmul.f32 %v643, 0.044715
    %v708 = vmul.f32 %v644, 0.044715
    %v709 = vmul.f32 %v645, 0.044715
    %v710 = vmul.f32 %v646, 0.044715
    %v711 = vmul.f32 %v647, 0.044715
    %v712 = vmul.f32 %v648, 0.044715
    %v713 = vmul.f32 %v649, 0.044715
    %v714 = vmul.f32 %v650, 0.044715
    %v715 = vmul.f32 %v651, 0.044715
    %v716 = vmul.f32 %v652, 0.044715
    %v717 = vmul.f32 %v653, 0.044715
    %v718 = vmul.f32 %v654, 0.044715
    %v719 = vmul.f32 %v655, 0.044715
    %v720 = vmul.f32 %v656, 0.044715
    %v721 = vmul.f32 %v657, 0.044715
    %v722 = vmul.f32 %v658, 0.044715
    %v723 = vmul.f32 %v659, 0.044715
    %v724 = vmul.f32 %v660, 0.044715
    %v725 = vmul.f32 %v661, 0.044715
    %v726 = vmul.f32 %v662, 0.044715
    %v727 = vmul.f32 %v663, 0.044715
    %v728 = vmul.f32 %v664, 0.044715
    %v729 = vmul.f32 %v665, 0.044715
    %v730 = vmul.f32 %v666, 0.044715
    %v731 = vmul.f32 %v667, 0.044715
    %v732 = vmul.f32 %v668, 0.044715
    %v733 = vmul.f32 %v669, 0.044715
    %v734 = vmul.f32 %v670, 0.044715
    %v735 = vmul.f32 %v671, 0.044715
    %v736 = vmul.f32 %v672, 0.044715
    %v737 = vmul.f32 %v673, 0.044715
    %v738 = vmul.f32 %v674, 0.044715
    %v739 = vmul.f32 %v675, 0.044715
    %v740 = vmul.f32 %v676, 0.044715
    %v741 = vmul.f32 %v677, 0.044715
    %v742 = vmul.f32 %v678, 0.044715
    %v743 = vmul.f32 %v679, 0.044715
    %v744 = vmul.f32 %v680, 0.044715
    %v745 = vmul.f32 %v681, 0.044715
    %v746 = vmul.f32 %v682, 0.044715
    %v747 = vmul.f32 %v683, 0.044715
    %v748 = vmul.f32 %v684, 0.044715
    %v749 = vmul.f32 %v685, 0.044715
    %v750 = vmul.f32 %v686, 0.044715
    %v751 = vmul.f32 %v687, 0.044715
    %v752 = vmul.f32 %v688, 0.044715
    %v753 = vmul.f32 %v689, 0.044715
    %v754 = vmul.f32 %v690, 0.044715
    %v755 = vmul.f32 %v691, 0.044715
    %v756 = vadd.f32 %v378, %v692
    %v757 = vadd.f32 %v427, %v693
    %v758 = vadd.f32 %v476, %v694
    %v759 = vadd.f32 %v525, %v695
    %v760 = vadd.f32 %v380, %v696
    %v761 = vadd.f32 %v429, %v697
    %v762 = vadd.f32 %v478, %v698
    %v763 = vadd.f32 %v527, %v699
    %v764 = vadd.f32 %v383, %v700
    %v765 = vadd.f32 %v432, %v701
    %v766 = vadd.f32 %v481, %v702
    %v767 = vadd.f32 %v530, %v703
    %v768 = vadd.f32 %v385, %v704
    %v769 = vadd.f32 %v434, %v705
    %v770 = vadd.f32 %v483, %v706
    %v771 = vadd.f32 %v532, %v707
    %v772 = vadd.f32 %v388, %v708
    %v773 = vadd.f32 %v437, %v709
    %v774 = vadd.f32 %v486, %v710
    %v775 = vadd.f32 %v535, %v711
    %v776 = vadd.f32 %v390, %v712
    %v777 = vadd.f32 %v439, %v713
    %v778 = vadd.f32 %v488, %v714
    %v779 = vadd.f32 %v537, %v715
    %v780 = vadd.f32 %v393, %v716
    %v781 = vadd.f32 %v442, %v717
    %v782 = vadd.f32 %v491, %v718
    %v783 = vadd.f32 %v540, %v719
    %v784 = vadd.f32 %v395, %v720
    %v785 = vadd.f32 %v444, %v721
    %v786 = vadd.f32 %v493, %v722
    %v787 = vadd.f32 %v542, %v723
    %v788 = vadd.f32 %v398, %v724
    %v789 = vadd.f32 %v447, %v725
    %v790 = vadd.f32 %v496, %v726
    %v791 = vadd.f32 %v545, %v727
    %v792 = vadd.f32 %v400, %v728
    %v793 = vadd.f32 %v449, %v729
    %v794 = vadd.f32 %v498, %v730
    %v795 = vadd.f32 %v547, %v731
    %v796 = vadd.f32 %v403, %v732
    %v797 = vadd.f32 %v452, %v733
    %v798 = vadd.f32 %v501, %v734
    %v799 = vadd.f32 %v550, %v735
    %v800 = vadd.f32 %v405, %v736
    %v801 = vadd.f32 %v454, %v737
    %v802 = vadd.f32 %v503, %v738
    %v803 = vadd.f32 %v552, %v739
    %v804 = vadd.f32 %v408, %v740
    %v805 = vadd.f32 %v457, %v741
    %v806 = vadd.f32 %v506, %v742
    %v807 = vadd.f32 %v555, %v743
    %v808 = vadd.f32 %v410, %v744
    %v809 = vadd.f32 %v459, %v745
    %v810 = vadd.f32 %v508, %v746
    %v811 = vadd.f32 %v557, %v747
    %v812 = vadd.f32 %v413, %v748
    %v813 = vadd.f32 %v462, %v749
    %v814 = vadd.f32 %v511, %v750
    %v815 = vadd.f32 %v560, %v751
    %v816 = vadd.f32 %v415, %v752
    %v817 = vadd.f32 %v464, %v753
    %v818 = vadd.f32 %v513, %v754
    %v819 = vadd.f32 %v562, %v755
    %v820 = vmul.f32 %v756, 0.7978846
    %v821 = vmul.f32 %v757, 0.7978846
    %v822 = vmul.f32 %v758, 0.7978846
    %v823 = vmul.f32 %v759, 0.7978846
    %v824 = vmul.f32 %v760, 0.7978846
    %v825 = vmul.f32 %v761, 0.7978846
    %v826 = vmul.f32 %v762, 0.7978846
    %v827 = vmul.f32 %v763, 0.7978846
    %v828 = vmul.f32 %v764, 0.7978846
    %v829 = vmul.f32 %v765, 0.7978846
    %v830 = vmul.f32 %v766, 0.7978846
    %v831 = vmul.f32 %v767, 0.7978846
    %v832 = vmul.f32 %v768, 0.7978846
    %v833 = vmul.f32 %v769, 0.7978846
    %v834 = vmul.f32 %v770, 0.7978846
    %v835 = vmul.f32 %v771, 0.7978846
    %v836 = vmul.f32 %v772, 0.7978846
    %v837 = vmul.f32 %v773, 0.7978846
    %v838 = vmul.f32 %v774, 0.7978846
    %v839 = vmul.f32 %v775, 0.7978846
    %v840 = vmul.f32 %v776, 0.7978846
    %v841 = vmul.f32 %v777, 0.7978846
    %v842 = vmul.f32 %v778, 0.7978846
    %v843 = vmul.f32 %v779, 0.7978846
    %v844 = vmul.f32 %v780, 0.7978846
    %v845 = vmul.f32 %v781, 0.7978846
    %v846 = vmul.f32 %v782, 0.7978846
    %v847 = vmul.f32 %v783, 0.7978846
    %v848 = vmul.f32 %v784, 0.7978846
    %v849 = vmul.f32 %v785, 0.7978846
    %v850 = vmul.f32 %v786, 0.7978846
    %v851 = vmul.f32 %v787, 0.7978846
    %v852 = vmul.f32 %v788, 0.7978846
    %v853 = vmul.f32 %v789, 0.7978846
    %v854 = vmul.f32 %v790, 0.7978846
    %v855 = vmul.f32 %v791, 0.7978846
    %v856 = vmul.f32 %v792, 0.7978846
    %v857 = vmul.f32 %v793, 0.7978846
    %v858 = vmul.f32 %v794, 0.7978846
    %v859 = vmul.f32 %v795, 0.7978846
    %v860 = vmul.f32 %v796, 0.7978846
    %v861 = vmul.f32 %v797, 0.7978846
    %v862 = vmul.f32 %v798, 0.7978846
    %v863 = vmul.f32 %v799, 0.7978846
    %v864 = vmul.f32 %v800, 0.7978846
    %v865 = vmul.f32 %v801, 0.7978846
    %v866 = vmul.f32 %v802, 0.7978846
    %v867 = vmul.f32 %v803, 0.7978846
    %v868 = vmul.f32 %v804, 0.7978846
    %v869 = vmul.f32 %v805, 0.7978846
    %v870 = vmul.f32 %v806, 0.7978846
    %v871 = vmul.f32 %v807, 0.7978846
    %v872 = vmul.f32 %v808, 0.7978846
    %v873 = vmul.f32 %v809, 0.7978846
    %v874 = vmul.f32 %v810, 0.7978846
    %v875 = vmul.f32 %v811, 0.7978846
    %v876 = vmul.f32 %v812, 0.7978846
    %v877 = vmul.f32 %v813, 0.7978846
    %v878 = vmul.f32 %v814, 0.7978846
    %v879 = vmul.f32 %v815, 0.7978846
    %v880 = vmul.f32 %v816, 0.7978846
    %v881 = vmul.f32 %v817, 0.7978846
    %v882 = vmul.f32 %v818, 0.7978846
    %v883 = vmul.f32 %v819, 0.7978846
    %v884 = vtanh.pop %v820
    %v885 = vtanh.pop %v821
    %v886 = vtanh.pop %v822
    %v887 = vtanh.pop %v823
    %v888 = vtanh.pop %v824
    %v889 = vtanh.pop %v825
    %v890 = vtanh.pop %v826
    %v891 = vtanh.pop %v827
    %v892 = vtanh.pop %v828
    %v893 = vtanh.pop %v829
    %v894 = vtanh.pop %v830
    %v895 = vtanh.pop %v831
    %v896 = vtanh.pop %v832
    %v897 = vtanh.pop %v833
    %v898 = vtanh.pop %v834
    %v899 = vtanh.pop %v835
    %v900 = vtanh.pop %v836
    %v901 = vtanh.pop %v837
    %v902 = vtanh.pop %v838
    %v903 = vtanh.pop %v839
    %v904 = vtanh.pop %v840
    %v905 = vtanh.pop %v841
    %v906 = vtanh.pop %v842
    %v907 = vtanh.pop %v843
    %v908 = vtanh.pop %v844
    %v909 = vtanh.pop %v845
    %v910 = vtanh.pop %v846
    %v911 = vtanh.pop %v847
    %v912 = vtanh.pop %v848
    %v913 = vtanh.pop %v849
    %v914 = vtanh.pop %v850
    %v915 = vtanh.pop %v851
    %v916 = vtanh.pop %v852
    %v917 = vtanh.pop %v853
    %v918 = vtanh.pop %v854
    %v919 = vtanh.pop %v855
    %v920 = vtanh.pop %v856
    %v921 = vtanh.pop %v857
    %v922 = vtanh.pop %v858
    %v923 = vtanh.pop %v859
    %v924 = vtanh.pop %v860
    %v925 = vtanh.pop %v861
    %v926 = vtanh.pop %v862
    %v927 = vtanh.pop %v863
    %v928 = vtanh.pop %v864
    %v929 = vtanh.pop %v865
    %v930 = vtanh.pop %v866
    %v931 = vtanh.pop %v867
    %v932 = vtanh.pop %v868
    %v933 = vtanh.pop %v869
    %v934 = vtanh.pop %v870
    %v935 = vtanh.pop %v871
    %v936 = vtanh.pop %v872
    %v937 = vtanh.pop %v873
    %v938 = vtanh.pop %v874
    %v939 = vtanh.pop %v875
    %v940 = vtanh.pop %v876
    %v941 = vtanh.pop %v877
    %v942 = vtanh.pop %v878
    %v943 = vtanh.pop %v879
    %v944 = vtanh.pop %v880
    %v945 = vtanh.pop %v881
    %v946 = vtanh.pop %v882
    %v947 = vtanh.pop %v883
    %v948 = vadd.f32 %v884, 1.0
    %v949 = vadd.f32 %v885, 1.0
    %v950 = vadd.f32 %v886, 1.0
    %v951 = vadd.f32 %v887, 1.0
    %v952 = vadd.f32 %v888, 1.0
    %v953 = vadd.f32 %v889, 1.0
    %v954 = vadd.f32 %v890, 1.0
    %v955 = vadd.f32 %v891, 1.0
    %v956 = vadd.f32 %v892, 1.0
    %v957 = vadd.f32 %v893, 1.0
    %v958 = vadd.f32 %v894, 1.0
    %v959 = vadd.f32 %v895, 1.0
    %v960 = vadd.f32 %v896, 1.0
    %v961 = vadd.f32 %v897, 1.0
    %v962 = vadd.f32 %v898, 1.0
    %v963 = vadd.f32 %v899, 1.0
    %v964 = vadd.f32 %v900, 1.0
    %v965 = vadd.f32 %v901, 1.0
    %v966 = vadd.f32 %v902, 1.0
    %v967 = vadd.f32 %v903, 1.0
    %v968 = vadd.f32 %v904, 1.0
    %v969 = vadd.f32 %v905, 1.0
    %v970 = vadd.f32 %v906, 1.0
    %v971 = vadd.f32 %v907, 1.0
    %v972 = vadd.f32 %v908, 1.0
    %v973 = vadd.f32 %v909, 1.0
    %v974 = vadd.f32 %v910, 1.0
    %v975 = vadd.f32 %v911, 1.0
    %v976 = vadd.f32 %v912, 1.0
    %v977 = vadd.f32 %v913, 1.0
    %v978 = vadd.f32 %v914, 1.0
    %v979 = vadd.f32 %v915, 1.0
    %v980 = vadd.f32 %v916, 1.0
    %v981 = vadd.f32 %v917, 1.0
    %v982 = vadd.f32 %v918, 1.0
    %v983 = vadd.f32 %v919, 1.0
    %v984 = vadd.f32 %v920, 1.0
    %v985 = vadd.f32 %v921, 1.0
    %v986 = vadd.f32 %v922, 1.0
    %v987 = vadd.f32 %v923, 1.0
    %v988 = vadd.f32 %v924, 1.0
    %v989 = vadd.f32 %v925, 1.0
    %v990 = vadd.f32 %v926, 1.0
    %v991 = vadd.f32 %v927, 1.0
    %v992 = vadd.f32 %v928, 1.0
    %v993 = vadd.f32 %v929, 1.0
    %v994 = vadd.f32 %v930, 1.0
    %v995 = vadd.f32 %v931, 1.0
    %v996 = vadd.f32 %v932, 1.0
    %v997 = vadd.f32 %v933, 1.0
    %v998 = vadd.f32 %v934, 1.0
    %v999 = vadd.f32 %v935, 1.0
    %v1000 = vadd.f32 %v936, 1.0
    %v1001 = vadd.f32 %v937, 1.0
    %v1002 = vadd.f32 %v938, 1.0
    %v1003 = vadd.f32 %v939, 1.0
    %v1004 = vadd.f32 %v940, 1.0
    %v1005 = vadd.f32 %v941, 1.0
    %v1006 = vadd.f32 %v942, 1.0
    %v1007 = vadd.f32 %v943, 1.0
    %v1008 = vadd.f32 %v944, 1.0
    %v1009 = vadd.f32 %v945, 1.0
    %v1010 = vadd.f32 %v946, 1.0
    %v1011 = vadd.f32 %v947, 1.0
    %v1012 = vmul.f32 %v948, 0.5
    %v1013 = vmul.f32 %v949, 0.5
    %v1014 = vmul.f32 %v950, 0.5
    %v1015 = vmul.f32 %v951, 0.5
    %v1016 = vmul.f32 %v952, 0.5
    %v1017 = vmul.f32 %v953, 0.5
    %v1018 = vmul.f32 %v954, 0.5
    %v1019 = vmul.f32 %v955, 0.5
    %v1020 = vmul.f32 %v956, 0.5
    %v1021 = vmul.f32 %v957, 0.5
    %v1022 = vmul.f32 %v958, 0.5
    %v1023 = vmul.f32 %v959, 0.5
    %v1024 = vmul.f32 %v960, 0.5
    %v1025 = vmul.f32 %v961, 0.5
    %v1026 = vmul.f32 %v962, 0.5
    %v1027 = vmul.f32 %v963, 0.5
    %v1028 = vmul.f32 %v964, 0.5
    %v1029 = vmul.f32 %v965, 0.5
    %v1030 = vmul.f32 %v966, 0.5
    %v1031 = vmul.f32 %v967, 0.5
    %v1032 = vmul.f32 %v968, 0.5
    %v1033 = vmul.f32 %v969, 0.5
    %v1034 = vmul.f32 %v970, 0.5
    %v1035 = vmul.f32 %v971, 0.5
    %v1036 = vmul.f32 %v972, 0.5
    %v1037 = vmul.f32 %v973, 0.5
    %v1038 = vmul.f32 %v974, 0.5
    %v1039 = vmul.f32 %v975, 0.5
    %v1040 = vmul.f32 %v976, 0.5
    %v1041 = vmul.f32 %v977, 0.5
    %v1042 = vmul.f32 %v978, 0.5
    %v1043 = vmul.f32 %v979, 0.5
    %v1044 = vmul.f32 %v980, 0.5
    %v1045 = vmul.f32 %v981, 0.5
    %v1046 = vmul.f32 %v982, 0.5
    %v1047 = vmul.f32 %v983, 0.5
    %v1048 = vmul.f32 %v984, 0.5
    %v1049 = vmul.f32 %v985, 0.5
    %v1050 = vmul.f32 %v986, 0.5
    %v1051 = vmul.f32 %v987, 0.5
    %v1052 = vmul.f32 %v988, 0.5
    %v1053 = vmul.f32 %v989, 0.5
    %v1054 = vmul.f32 %v990, 0.5
    %v1055 = vmul.f32 %v991, 0.5
    %v1056 = vmul.f32 %v992, 0.5
    %v1057 = vmul.f32 %v993, 0.5
    %v1058 = vmul.f32 %v994, 0.5
    %v1059 = vmul.f32 %v995, 0.5
    %v1060 = vmul.f32 %v996, 0.5
    %v1061 = vmul.f32 %v997, 0.5
    %v1062 = vmul.f32 %v998, 0.5
    %v1063 = vmul.f32 %v999, 0.5
    %v1064 = vmul.f32 %v1000, 0.5
    %v1065 = vmul.f32 %v1001, 0.5
    %v1066 = vmul.f32 %v1002, 0.5
    %v1067 = vmul.f32 %v1003, 0.5
    %v1068 = vmul.f32 %v1004, 0.5
    %v1069 = vmul.f32 %v1005, 0.5
    %v1070 = vmul.f32 %v1006, 0.5
    %v1071 = vmul.f32 %v1007, 0.5
    %v1072 = vmul.f32 %v1008, 0.5
    %v1073 = vmul.f32 %v1009, 0.5
    %v1074 = vmul.f32 %v1010, 0.5
    %v1075 = vmul.f32 %v1011, 0.5
    %v1076 = vmul.f32 %v378, %v1012
    %v1077 = vmul.f32 %v427, %v1013
    %v1078 = vmul.f32 %v476, %v1014
    %v1079 = vmul.f32 %v525, %v1015
    %v1080 = vmul.f32 %v380, %v1016
    %v1081 = vmul.f32 %v429, %v1017
    %v1082 = vmul.f32 %v478, %v1018
    %v1083 = vmul.f32 %v527, %v1019
    %v1084 = vmul.f32 %v383, %v1020
    %v1085 = vmul.f32 %v432, %v1021
    %v1086 = vmul.f32 %v481, %v1022
    %v1087 = vmul.f32 %v530, %v1023
    %v1088 = vmul.f32 %v385, %v1024
    %v1089 = vmul.f32 %v434, %v1025
    %v1090 = vmul.f32 %v483, %v1026
    %v1091 = vmul.f32 %v532, %v1027
    %v1092 = vmul.f32 %v388, %v1028
    %v1093 = vmul.f32 %v437, %v1029
    %v1094 = vmul.f32 %v486, %v1030
    %v1095 = vmul.f32 %v535, %v1031
    %v1096 = vmul.f32 %v390, %v1032
    %v1097 = vmul.f32 %v439, %v1033
    %v1098 = vmul.f32 %v488, %v1034
    %v1099 = vmul.f32 %v537, %v1035
    %v1100 = vmul.f32 %v393, %v1036
    %v1101 = vmul.f32 %v442, %v1037
    %v1102 = vmul.f32 %v491, %v1038
    %v1103 = vmul.f32 %v540, %v1039
    %v1104 = vmul.f32 %v395, %v1040
    %v1105 = vmul.f32 %v444, %v1041
    %v1106 = vmul.f32 %v493, %v1042
    %v1107 = vmul.f32 %v542, %v1043
    %v1108 = vmul.f32 %v398, %v1044
    %v1109 = vmul.f32 %v447, %v1045
    %v1110 = vmul.f32 %v496, %v1046
    %v1111 = vmul.f32 %v545, %v1047
    %v1112 = vmul.f32 %v400, %v1048
    %v1113 = vmul.f32 %v449, %v1049
    %v1114 = vmul.f32 %v498, %v1050
    %v1115 = vmul.f32 %v547, %v1051
    %v1116 = vmul.f32 %v403, %v1052
    %v1117 = vmul.f32 %v452, %v1053
    %v1118 = vmul.f32 %v501, %v1054
    %v1119 = vmul.f32 %v550, %v1055
    %v1120 = vmul.f32 %v405, %v1056
    %v1121 = vmul.f32 %v454, %v1057
    %v1122 = vmul.f32 %v503, %v1058
    %v1123 = vmul.f32 %v552, %v1059
    %v1124 = vmul.f32 %v408, %v1060
    %v1125 = vmul.f32 %v457, %v1061
    %v1126 = vmul.f32 %v506, %v1062
    %v1127 = vmul.f32 %v555, %v1063
    %v1128 = vmul.f32 %v410, %v1064
    %v1129 = vmul.f32 %v459, %v1065
    %v1130 = vmul.f32 %v508, %v1066
    %v1131 = vmul.f32 %v557, %v1067
    %v1132 = vmul.f32 %v413, %v1068
    %v1133 = vmul.f32 %v462, %v1069
    %v1134 = vmul.f32 %v511, %v1070
    %v1135 = vmul.f32 %v560, %v1071
    %v1136 = vmul.f32 %v415, %v1072
    %v1137 = vmul.f32 %v464, %v1073
    %v1138 = vmul.f32 %v513, %v1074
    %v1139 = vmul.f32 %v562, %v1075
    %v1140 = vld [vmem:[#allocation2] sm:$0xff]
    %v1141 = vld [vmem:[#allocation2 + $0x8] sm:$0xff]
    %v1142 = vld [vmem:[#allocation2 + $0x10] sm:$0xff]
    %v1143 = vld [vmem:[#allocation2 + $0x18] sm:$0xff]
    %v1144 = vld [vmem:[#allocation2 + $0x20] sm:$0xff]
    %v1145 = vld [vmem:[#allocation2 + $0x28] sm:$0xff]
    %v1146 = vld [vmem:[#allocation2 + $0x30] sm:$0xff]
    %v1147 = vld [vmem:[#allocation2 + $0x38] sm:$0xff]
    %v1148 = vld [vmem:[#allocation2 + $0x40] sm:$0xff]
    %v1149 = vld [vmem:[#allocation2 + $0x48] sm:$0xff]
    %v1150 = vld [vmem:[#allocation2 + $0x50] sm:$0xff]
    %v1151 = vld [vmem:[#allocation2 + $0x58] sm:$0xff]
    %v1152 = vld [vmem:[#allocation2 + $0x60] sm:$0xff]
    %v1153 = vld [vmem:[#allocation2 + $0x68] sm:$0xff]
    %v1154 = vld [vmem:[#allocation2 + $0x70] sm:$0xff]
    %v1155 = vld [vmem:[#allocation2 + $0x78] sm:$0xff]
    %v1156 = vpack.c.bf16 %v1080, %v1076
    %v1157 = vpack.c.bf16 %v1081, %v1077
    %v1158 = vpack.c.bf16 %v1082, %v1078
    %v1159 = vpack.c.bf16 %v1083, %v1079
    %v1160 = vpack.c.bf16 %v1088, %v1084
    %v1161 = vpack.c.bf16 %v1089, %v1085
    %v1162 = vpack.c.bf16 %v1090, %v1086
    %v1163 = vpack.c.bf16 %v1091, %v1087
    %v1164 = vpack.c.bf16 %v1096, %v1092
    %v1165 = vpack.c.bf16 %v1097, %v1093
    %v1166 = vpack.c.bf16 %v1098, %v1094
    %v1167 = vpack.c.bf16 %v1099, %v1095
    %v1168 = vpack.c.bf16 %v1104, %v1100
    %v1169 = vpack.c.bf16 %v1105, %v1101
    %v1170 = vpack.c.bf16 %v1106, %v1102
    %v1171 = vpack.c.bf16 %v1107, %v1103
    %v1172 = vpack.c.bf16 %v1112, %v1108
    %v1173 = vpack.c.bf16 %v1113, %v1109
    %v1174 = vpack.c.bf16 %v1114, %v1110
    %v1175 = vpack.c.bf16 %v1115, %v1111
    %v1176 = vpack.c.bf16 %v1120, %v1116
    %v1177 = vpack.c.bf16 %v1121, %v1117
    %v1178 = vpack.c.bf16 %v1122, %v1118
    %v1179 = vpack.c.bf16 %v1123, %v1119
    %v1180 = vpack.c.bf16 %v1128, %v1124
    %v1181 = vpack.c.bf16 %v1129, %v1125
    %v1182 = vpack.c.bf16 %v1130, %v1126
    %v1183 = vpack.c.bf16 %v1131, %v1127
    %v1184 = vpack.c.bf16 %v1136, %v1132
    %v1185 = vpack.c.bf16 %v1137, %v1133
    %v1186 = vpack.c.bf16 %v1138, %v1134
    %v1187 = vpack.c.bf16 %v1139, %v1135
    %v1188 = vld [vmem:[#allocation9] sm:$0xf]
    %v1189 = vld [vmem:[#allocation9 + $0x4] sm:$0xf]
    %v1190 = vld [vmem:[#allocation9 + $0x8] sm:$0xf]
    %v1191 = vld [vmem:[#allocation9 + $0xc] sm:$0xf]
    %v1192 = vld [vmem:[#allocation9 + $0x10] sm:$0xf]
    %v1193 = vld [vmem:[#allocation9 + $0x14] sm:$0xf]
    %v1194 = vld [vmem:[#allocation9 + $0x18] sm:$0xf]
    %v1195 = vld [vmem:[#allocation9 + $0x1c] sm:$0xf]
    %v1196 = vld [vmem:[#allocation9 + $0x20] sm:$0xf]
    %v1197 = vld [vmem:[#allocation9 + $0x24] sm:$0xf]
    %v1198 = vld [vmem:[#allocation9 + $0x28] sm:$0xf]
    %v1199 = vld [vmem:[#allocation9 + $0x2c] sm:$0xf]
    %v1200 = vld [vmem:[#allocation9 + $0x30] sm:$0xf]
    %v1201 = vld [vmem:[#allocation9 + $0x34] sm:$0xf]
    %v1202 = vld [vmem:[#allocation9 + $0x38] sm:$0xf]
    %v1203 = vld [vmem:[#allocation9 + $0x3c] sm:$0xf]
    %v1204 = vld [vmem:[#allocation9 + $0x40] sm:$0xf]
    %v1205 = vld [vmem:[#allocation9 + $0x44] sm:$0xf]
    %v1206 = vld [vmem:[#allocation9 + $0x48] sm:$0xf]
    %v1207 = vld [vmem:[#allocation9 + $0x4c] sm:$0xf]
    %v1208 = vld [vmem:[#allocation9 + $0x50] sm:$0xf]
    %v1209 = vld [vmem:[#allocation9 + $0x54] sm:$0xf]
    %v1210 = vld [vmem:[#allocation9 + $0x58] sm:$0xf]
    %v1211 = vld [vmem:[#allocation9 + $0x5c] sm:$0xf]
    %v1212 = vld [vmem:[#allocation9 + $0x60] sm:$0xf]
    %v1213 = vld [vmem:[#allocation9 + $0x64] sm:$0xf]
    %v1214 = vld [vmem:[#allocation9 + $0x68] sm:$0xf]
    %v1215 = vld [vmem:[#allocation9 + $0x6c] sm:$0xf]
    %v1216 = vld [vmem:[#allocation9 + $0x70] sm:$0xf]
    %v1217 = vld [vmem:[#allocation9 + $0x74] sm:$0xf]
    %v1218 = vld [vmem:[#allocation9 + $0x78] sm:$0xf]
    %v1219 = vld [vmem:[#allocation9 + $0x7c] sm:$0xf]
    %v1220 = vld [vmem:[#allocation9 + $0x80] sm:$0xf]
    %v1221 = vld [vmem:[#allocation9 + $0x84] sm:$0xf]
    %v1222 = vld [vmem:[#allocation9 + $0x88] sm:$0xf]
    %v1223 = vld [vmem:[#allocation9 + $0x8c] sm:$0xf]
    %v1224 = vld [vmem:[#allocation9 + $0x90] sm:$0xf]
    %v1225 = vld [vmem:[#allocation9 + $0x94] sm:$0xf]
    %v1226 = vld [vmem:[#allocation9 + $0x98] sm:$0xf]
    %v1227 = vld [vmem:[#allocation9 + $0x9c] sm:$0xf]
    %v1228 = vld [vmem:[#allocation9 + $0xa0] sm:$0xf]
    %v1229 = vld [vmem:[#allocation9 + $0xa4] sm:$0xf]
    %v1230 = vld [vmem:[#allocation9 + $0xa8] sm:$0xf]
    %v1231 = vld [vmem:[#allocation9 + $0xac] sm:$0xf]
    %v1232 = vld [vmem:[#allocation9 + $0xb0] sm:$0xf]
    %v1233 = vld [vmem:[#allocation9 + $0xb4] sm:$0xf]
    %v1234 = vld [vmem:[#allocation9 + $0xb8] sm:$0xf]
    %v1235 = vld [vmem:[#allocation9 + $0xbc] sm:$0xf]
    %v1236 = vld [vmem:[#allocation9 + $0xc0] sm:$0xf]
    %v1237 = vld [vmem:[#allocation9 + $0xc4] sm:$0xf]
    %v1238 = vld [vmem:[#allocation9 + $0xc8] sm:$0xf]
    %v1239 = vld [vmem:[#allocation9 + $0xcc] sm:$0xf]
    %v1240 = vld [vmem:[#allocation9 + $0xd0] sm:$0xf]
    %v1241 = vld [vmem:[#allocation9 + $0xd4] sm:$0xf]
    %v1242 = vld [vmem:[#allocation9 + $0xd8] sm:$0xf]
    %v1243 = vld [vmem:[#allocation9 + $0xdc] sm:$0xf]
    %v1244 = vld [vmem:[#allocation9 + $0xe0] sm:$0xf]
    %v1245 = vld [vmem:[#allocation9 + $0xe4] sm:$0xf]
    %v1246 = vld [vmem:[#allocation9 + $0xe8] sm:$0xf]
    %v1247 = vld [vmem:[#allocation9 + $0xec] sm:$0xf]
    %v1248 = vld [vmem:[#allocation9 + $0xf0] sm:$0xf]
    %v1249 = vld [vmem:[#allocation9 + $0xf4] sm:$0xf]
    %v1250 = vld [vmem:[#allocation9 + $0xf8] sm:$0xf]
    %v1251 = vld [vmem:[#allocation9 + $0xfc] sm:$0xf]
    %v1316 = vunpack.c.l.b16 %v1188
    %v1317 = vunpack.c.l.b16 %v1189
    %v1318 = vunpack.c.l.b16 %v1190
    %v1319 = vunpack.c.l.b16 %v1191
    %v1320 = vunpack.c.l.b16 %v1192
    %v1321 = vunpack.c.l.b16 %v1193
    %v1322 = vunpack.c.l.b16 %v1194
    %v1323 = vunpack.c.l.b16 %v1195
    %v1324 = vunpack.c.l.b16 %v1196
    %v1325 = vunpack.c.l.b16 %v1197
    %v1326 = vunpack.c.l.b16 %v1198
    %v1327 = vunpack.c.l.b16 %v1199
    %v1328 = vunpack.c.l.b16 %v1200
    %v1329 = vunpack.c.l.b16 %v1201
    %v1330 = vunpack.c.l.b16 %v1202
    %v1331 = vunpack.c.l.b16 %v1203
    %v1332 = vunpack.c.l.b16 %v1204
    %v1333 = vunpack.c.l.b16 %v1205
    %v1334 = vunpack.c.l.b16 %v1206
    %v1335 = vunpack.c.l.b16 %v1207
    %v1336 = vunpack.c.l.b16 %v1208
    %v1337 = vunpack.c.l.b16 %v1209
    %v1338 = vunpack.c.l.b16 %v1210
    %v1339 = vunpack.c.l.b16 %v1211
    %v1340 = vunpack.c.l.b16 %v1212
    %v1341 = vunpack.c.l.b16 %v1213
    %v1342 = vunpack.c.l.b16 %v1214
    %v1343 = vunpack.c.l.b16 %v1215
    %v1344 = vunpack.c.l.b16 %v1216
    %v1345 = vunpack.c.l.b16 %v1217
    %v1346 = vunpack.c.l.b16 %v1218
    %v1347 = vunpack.c.l.b16 %v1219
    %v1348 = vunpack.c.l.b16 %v1220
    %v1349 = vunpack.c.l.b16 %v1221
    %v1350 = vunpack.c.l.b16 %v1222
    %v1351 = vunpack.c.l.b16 %v1223
    %v1352 = vunpack.c.l.b16 %v1224
    %v1353 = vunpack.c.l.b16 %v1225
    %v1354 = vunpack.c.l.b16 %v1226
    %v1355 = vunpack.c.l.b16 %v1227
    %v1356 = vunpack.c.l.b16 %v1228
    %v1357 = vunpack.c.l.b16 %v1229
    %v1358 = vunpack.c.l.b16 %v1230
    %v1359 = vunpack.c.l.b16 %v1231
    %v1360 = vunpack.c.l.b16 %v1232
    %v1361 = vunpack.c.l.b16 %v1233
    %v1362 = vunpack.c.l.b16 %v1234
    %v1363 = vunpack.c.l.b16 %v1235
    %v1364 = vunpack.c.l.b16 %v1236
    %v1365 = vunpack.c.l.b16 %v1237
    %v1366 = vunpack.c.l.b16 %v1238
    %v1367 = vunpack.c.l.b16 %v1239
    %v1368 = vunpack.c.l.b16 %v1240
    %v1369 = vunpack.c.l.b16 %v1241
    %v1370 = vunpack.c.l.b16 %v1242
    %v1371 = vunpack.c.l.b16 %v1243
    %v1372 = vunpack.c.l.b16 %v1244
    %v1373 = vunpack.c.l.b16 %v1245
    %v1374 = vunpack.c.l.b16 %v1246
    %v1375 = vunpack.c.l.b16 %v1247
    %v1376 = vunpack.c.l.b16 %v1248
    %v1377 = vunpack.c.l.b16 %v1249
    %v1378 = vunpack.c.l.b16 %v1250
    %v1379 = vunpack.c.l.b16 %v1251
    %v1380 = vpack.c.b16 %v1317, %v1316
    %v1381 = vpack.c.b16 %v1319, %v1318
    %v1382 = vpack.c.b16 %v1321, %v1320
    %v1383 = vpack.c.b16 %v1323, %v1322
    %v1384 = vpack.c.b16 %v1325, %v1324
    %v1385 = vpack.c.b16 %v1327, %v1326
    %v1386 = vpack.c.b16 %v1329, %v1328
    %v1387 = vpack.c.b16 %v1331, %v1330
    %v1388 = vpack.c.b16 %v1333, %v1332
    %v1389 = vpack.c.b16 %v1335, %v1334
    %v1390 = vpack.c.b16 %v1337, %v1336
    %v1391 = vpack.c.b16 %v1339, %v1338
    %v1392 = vpack.c.b16 %v1341, %v1340
    %v1393 = vpack.c.b16 %v1343, %v1342
    %v1394 = vpack.c.b16 %v1345, %v1344
    %v1395 = vpack.c.b16 %v1347, %v1346
    %v1396 = vpack.c.b16 %v1349, %v1348
    %v1397 = vpack.c.b16 %v1351, %v1350
    %v1398 = vpack.c.b16 %v1353, %v1352
    %v1399 = vpack.c.b16 %v1355, %v1354
    %v1400 = vpack.c.b16 %v1357, %v1356
    %v1401 = vpack.c.b16 %v1359, %v1358
    %v1402 = vpack.c.b16 %v1361, %v1360
    %v1403 = vpack.c.b16 %v1363, %v1362
    %v1404 = vpack.c.b16 %v1365, %v1364
    %v1405 = vpack.c.b16 %v1367, %v1366
    %v1406 = vpack.c.b16 %v1369, %v1368
    %v1407 = vpack.c.b16 %v1371, %v1370
    %v1408 = vpack.c.b16 %v1373, %v1372
    %v1409 = vpack.c.b16 %v1375, %v1374
    %v1410 = vpack.c.b16 %v1377, %v1376
    %v1411 = vpack.c.b16 %v1379, %v1378
    %1444 = vmatpush.bf16.msra.mxu0 %v1387
    %1445 = vmatpush.bf16.msra.mxu0 %v1386
    %1446 = vmatpush.bf16.msra.mxu0 %v1385
    %1447 = vmatpush.bf16.msra.mxu0 %v1384
    %1448 = vmatpush.bf16.msra.mxu0 %v1383
    %1449 = vmatpush.bf16.msra.mxu0 %v1382
    %1450 = vmatpush.bf16.msra.mxu0 %v1381
    %1451 = vmatpush.bf16.msra.mxu0 %v1380
    %1452 = vmatmul.bf16.gmra.mxu0 %v1156
    %v1453 = vpop.f32.mrf.mxu0
    %v1454 = vadd.f32 0.0, %v1453
    %v1455 = vpop.f32.mrf.mxu0
    %v1456 = vadd.f32 0.0, %v1455
    %1457 = vmatmul.bf16.gmra.mxu0 %v1160
    %v1458 = vpop.f32.mrf.mxu0
    %v1459 = vadd.f32 0.0, %v1458
    %v1460 = vpop.f32.mrf.mxu0
    %v1461 = vadd.f32 0.0, %v1460
    %1462 = vmatmul.bf16.gmra.mxu0 %v1164
    %v1463 = vpop.f32.mrf.mxu0
    %v1464 = vadd.f32 0.0, %v1463
    %v1465 = vpop.f32.mrf.mxu0
    %v1466 = vadd.f32 0.0, %v1465
    %1467 = vmatmul.bf16.gmra.mxu0 %v1168
    %v1468 = vpop.f32.mrf.mxu0
    %v1469 = vadd.f32 0.0, %v1468
    %v1470 = vpop.f32.mrf.mxu0
    %v1471 = vadd.f32 0.0, %v1470
    %1472 = vmatmul.bf16.gmra.mxu0 %v1172
    %v1473 = vpop.f32.mrf.mxu0
    %v1474 = vadd.f32 0.0, %v1473
    %v1475 = vpop.f32.mrf.mxu0
    %v1476 = vadd.f32 0.0, %v1475
    %1477 = vmatmul.bf16.gmra.mxu0 %v1176
    %v1478 = vpop.f32.mrf.mxu0
    %v1479 = vadd.f32 0.0, %v1478
    %v1480 = vpop.f32.mrf.mxu0
    %v1481 = vadd.f32 0.0, %v1480
    %1482 = vmatmul.bf16.gmra.mxu0 %v1180
    %v1483 = vpop.f32.mrf.mxu0
    %v1484 = vadd.f32 0.0, %v1483
    %v1485 = vpop.f32.mrf.mxu0
    %v1486 = vadd.f32 0.0, %v1485
    %1487 = vmatmul.bf16.gmra.mxu0 %v1184
    %v1488 = vpop.f32.mrf.mxu0
    %v1489 = vadd.f32 0.0, %v1488
    %v1490 = vpop.f32.mrf.mxu0
    %v1491 = vadd.f32 0.0, %v1490
    %1492 = vdwg.mxu0
    %1493 = vmatpush.bf16.msra.mxu0 %v1395
    %1494 = vmatpush.bf16.msra.mxu0 %v1394
    %1495 = vmatpush.bf16.msra.mxu0 %v1393
    %1496 = vmatpush.bf16.msra.mxu0 %v1392
    %1497 = vmatpush.bf16.msra.mxu0 %v1391
    %1498 = vmatpush.bf16.msra.mxu0 %v1390
    %1499 = vmatpush.bf16.msra.mxu0 %v1389
    %1500 = vmatpush.bf16.msra.mxu0 %v1388
    %1501 = vmatmul.bf16.gmra.mxu0 %v1157
    %v1502 = vpop.f32.mrf.mxu0
    %v1503 = vadd.f32 %v1454, %v1502
    %v1504 = vpop.f32.mrf.mxu0
    %v1505 = vadd.f32 %v1456, %v1504
    %1506 = vmatmul.bf16.gmra.mxu0 %v1161
    %v1507 = vpop.f32.mrf.mxu0
    %v1508 = vadd.f32 %v1459, %v1507
    %v1509 = vpop.f32.mrf.mxu0
    %v1510 = vadd.f32 %v1461, %v1509
    %1511 = vmatmul.bf16.gmra.mxu0 %v1165
    %v1512 = vpop.f32.mrf.mxu0
    %v1513 = vadd.f32 %v1464, %v1512
    %v1514 = vpop.f32.mrf.mxu0
    %v1515 = vadd.f32 %v1466, %v1514
    %1516 = vmatmul.bf16.gmra.mxu0 %v1169
    %v1517 = vpop.f32.mrf.mxu0
    %v1518 = vadd.f32 %v1469, %v1517
    %v1519 = vpop.f32.mrf.mxu0
    %v1520 = vadd.f32 %v1471, %v1519
    %1521 = vmatmul.bf16.gmra.mxu0 %v1173
    %v1522 = vpop.f32.mrf.mxu0
    %v1523 = vadd.f32 %v1474, %v1522
    %v1524 = vpop.f32.mrf.mxu0
    %v1525 = vadd.f32 %v1476, %v1524
    %1526 = vmatmul.bf16.gmra.mxu0 %v1177
    %v1527 = vpop.f32.mrf.mxu0
    %v1528 = vadd.f32 %v1479, %v1527
    %v1529 = vpop.f32.mrf.mxu0
    %v1530 = vadd.f32 %v1481, %v1529
    %1531 = vmatmul.bf16.gmra.mxu0 %v1181
    %v1532 = vpop.f32.mrf.mxu0
    %v1533 = vadd.f32 %v1484, %v1532
    %v1534 = vpop.f32.mrf.mxu0
    %v1535 = vadd.f32 %v1486, %v1534
    %1536 = vmatmul.bf16.gmra.mxu0 %v1185
    %v1537 = vpop.f32.mrf.mxu0
    %v1538 = vadd.f32 %v1489, %v1537
    %v1539 = vpop.f32.mrf.mxu0
    %v1540 = vadd.f32 %v1491, %v1539
    %1541 = vdwg.mxu0
    %1542 = vmatpush.bf16.msra.mxu0 %v1403
    %1543 = vmatpush.bf16.msra.mxu0 %v1402
    %1544 = vmatpush.bf16.msra.mxu0 %v1401
    %1545 = vmatpush.bf16.msra.mxu0 %v1400
    %1546 = vmatpush.bf16.msra.mxu0 %v1399
    %1547 = vmatpush.bf16.msra.mxu0 %v1398
    %1548 = vmatpush.bf16.msra.mxu0 %v1397
    %1549 = vmatpush.bf16.msra.mxu0 %v1396
    %1550 = vmatmul.bf16.gmra.mxu0 %v1158
    %v1551 = vpop.f32.mrf.mxu0
    %v1552 = vadd.f32 %v1503, %v1551
    %v1553 = vpop.f32.mrf.mxu0
    %v1554 = vadd.f32 %v1505, %v1553
    %1555 = vmatmul.bf16.gmra.mxu0 %v1162
    %v1556 = vpop.f32.mrf.mxu0
    %v1557 = vadd.f32 %v1508, %v1556
    %v1558 = vpop.f32.mrf.mxu0
    %v1559 = vadd.f32 %v1510, %v1558
    %1560 = vmatmul.bf16.gmra.mxu0 %v1166
    %v1561 = vpop.f32.mrf.mxu0
    %v1562 = vadd.f32 %v1513, %v1561
    %v1563 = vpop.f32.mrf.mxu0
    %v1564 = vadd.f32 %v1515, %v1563
    %1565 = vmatmul.bf16.gmra.mxu0 %v1170
    %v1566 = vpop.f32.mrf.mxu0
    %v1567 = vadd.f32 %v1518, %v1566
    %v1568 = vpop.f32.mrf.mxu0
    %v1569 = vadd.f32 %v1520, %v1568
    %1570 = vmatmul.bf16.gmra.mxu0 %v1174
    %v1571 = vpop.f32.mrf.mxu0
    %v1572 = vadd.f32 %v1523, %v1571
    %v1573 = vpop.f32.mrf.mxu0
    %v1574 = vadd.f32 %v1525, %v1573
    %1575 = vmatmul.bf16.gmra.mxu0 %v1178
    %v1576 = vpop.f32.mrf.mxu0
    %v1577 = vadd.f32 %v1528, %v1576
    %v1578 = vpop.f32.mrf.mxu0
    %v1579 = vadd.f32 %v1530, %v1578
    %1580 = vmatmul.bf16.gmra.mxu0 %v1182
    %v1581 = vpop.f32.mrf.mxu0
    %v1582 = vadd.f32 %v1533, %v1581
    %v1583 = vpop.f32.mrf.mxu0
    %v1584 = vadd.f32 %v1535, %v1583
    %1585 = vmatmul.bf16.gmra.mxu0 %v1186
    %v1586 = vpop.f32.mrf.mxu0
    %v1587 = vadd.f32 %v1538, %v1586
    %v1588 = vpop.f32.mrf.mxu0
    %v1589 = vadd.f32 %v1540, %v1588
    %1590 = vdwg.mxu0
    %1591 = vmatpush.bf16.msra.mxu0 %v1411
    %1592 = vmatpush.bf16.msra.mxu0 %v1410
    %1593 = vmatpush.bf16.msra.mxu0 %v1409
    %1594 = vmatpush.bf16.msra.mxu0 %v1408
    %1595 = vmatpush.bf16.msra.mxu0 %v1407
    %1596 = vmatpush.bf16.msra.mxu0 %v1406
    %1597 = vmatpush.bf16.msra.mxu0 %v1405
    %1598 = vmatpush.bf16.msra.mxu0 %v1404
    %1599 = vmatmul.bf16.gmra.mxu0 %v1159
    %v1600 = vpop.f32.mrf.mxu0
    %v1601 = vadd.f32 %v1552, %v1600
    %v1602 = vpop.f32.mrf.mxu0
    %v1603 = vadd.f32 %v1554, %v1602
    %1604 = vmatmul.bf16.gmra.mxu0 %v1163
    %v1605 = vpop.f32.mrf.mxu0
    %v1606 = vadd.f32 %v1557, %v1605
    %v1607 = vpop.f32.mrf.mxu0
    %v1608 = vadd.f32 %v1559, %v1607
    %1609 = vmatmul.bf16.gmra.mxu0 %v1167
    %v1610 = vpop.f32.mrf.mxu0
    %v1611 = vadd.f32 %v1562, %v1610
    %v1612 = vpop.f32.mrf.mxu0
    %v1613 = vadd.f32 %v1564, %v1612
    %1614 = vmatmul.bf16.gmra.mxu0 %v1171
    %v1615 = vpop.f32.mrf.mxu0
    %v1616 = vadd.f32 %v1567, %v1615
    %v1617 = vpop.f32.mrf.mxu0
    %v1618 = vadd.f32 %v1569, %v1617
    %1619 = vmatmul.bf16.gmra.mxu0 %v1175
    %v1620 = vpop.f32.mrf.mxu0
    %v1621 = vadd.f32 %v1572, %v1620
    %v1622 = vpop.f32.mrf.mxu0
    %v1623 = vadd.f32 %v1574, %v1622
    %1624 = vmatmul.bf16.gmra.mxu0 %v1179
    %v1625 = vpop.f32.mrf.mxu0
    %v1626 = vadd.f32 %v1577, %v1625
    %v1627 = vpop.f32.mrf.mxu0
    %v1628 = vadd.f32 %v1579, %v1627
    %1629 = vmatmul.bf16.gmra.mxu0 %v1183
    %v1630 = vpop.f32.mrf.mxu0
    %v1631 = vadd.f32 %v1582, %v1630
    %v1632 = vpop.f32.mrf.mxu0
    %v1633 = vadd.f32 %v1584, %v1632
    %1634 = vmatmul.bf16.gmra.mxu0 %v1187
    %v1635 = vpop.f32.mrf.mxu0
    %v1636 = vadd.f32 %v1587, %v1635
    %v1637 = vpop.f32.mrf.mxu0
    %v1638 = vadd.f32 %v1589, %v1637
    %1639 = vdwg.mxu0
    %v1640 = vadd.f32 %v1140, %v1601
    %v1641 = vadd.f32 %v1141, %v1603
    %v1642 = vadd.f32 %v1142, %v1606
    %v1643 = vadd.f32 %v1143, %v1608
    %v1644 = vadd.f32 %v1144, %v1611
    %v1645 = vadd.f32 %v1145, %v1613
    %v1646 = vadd.f32 %v1146, %v1616
    %v1647 = vadd.f32 %v1147, %v1618
    %v1648 = vadd.f32 %v1148, %v1621
    %v1649 = vadd.f32 %v1149, %v1623
    %v1650 = vadd.f32 %v1150, %v1626
    %v1651 = vadd.f32 %v1151, %v1628
    %v1652 = vadd.f32 %v1152, %v1631
    %v1653 = vadd.f32 %v1153, %v1633
    %v1654 = vadd.f32 %v1154, %v1636
    %v1655 = vadd.f32 %v1155, %v1638
    %1656 = vst [vmem:[#allocation2] sm:$0xff] %v1640
    %1657 = vst [vmem:[#allocation2 + $0x8] sm:$0xff] %v1641
    %1658 = vst [vmem:[#allocation2 + $0x10] sm:$0xff] %v1642
    %1659 = vst [vmem:[#allocation2 + $0x18] sm:$0xff] %v1643
    %1660 = vst [vmem:[#allocation2 + $0x20] sm:$0xff] %v1644
    %1661 = vst [vmem:[#allocation2 + $0x28] sm:$0xff] %v1645
    %1662 = vst [vmem:[#allocation2 + $0x30] sm:$0xff] %v1646
    %1663 = vst [vmem:[#allocation2 + $0x38] sm:$0xff] %v1647
    %1664 = vst [vmem:[#allocation2 + $0x40] sm:$0xff] %v1648
    %1665 = vst [vmem:[#allocation2 + $0x48] sm:$0xff] %v1649
    %1666 = vst [vmem:[#allocation2 + $0x50] sm:$0xff] %v1650
    %1667 = vst [vmem:[#allocation2 + $0x58] sm:$0xff] %v1651
    %1668 = vst [vmem:[#allocation2 + $0x60] sm:$0xff] %v1652
    %1669 = vst [vmem:[#allocation2 + $0x68] sm:$0xff] %v1653
    %1670 = vst [vmem:[#allocation2 + $0x70] sm:$0xff] %v1654
    %1671 = vst [vmem:[#allocation2 + $0x78] sm:$0xff] %v1655
    // Predicated region
    $region42: #{tpu_custom_call.1} parent=1 // pred_check
      %p1672 = pneg %p82
    $region43: #{tpu_custom_call.1} parent=1 // pred_check_branch
      %1674 = sbr.rel (%p1672) target = $region45
    $region44: #{tpu_custom_call.1} parent=1 // pred_region
      %v1675 = vld [vmem:[#allocation2] sm:$0xff]
      %v1676 = vld [vmem:[#allocation2 + $0x8] sm:$0xff]
      %v1677 = vld [vmem:[#allocation2 + $0x10] sm:$0xff]
      %v1678 = vld [vmem:[#allocation2 + $0x18] sm:$0xff]
      %v1679 = vld [vmem:[#allocation2 + $0x20] sm:$0xff]
      %v1680 = vld [vmem:[#allocation2 + $0x28] sm:$0xff]
      %v1681 = vld [vmem:[#allocation2 + $0x30] sm:$0xff]
      %v1682 = vld [vmem:[#allocation2 + $0x38] sm:$0xff]
      %v1683 = vld [vmem:[#allocation2 + $0x40] sm:$0xff]
      %v1684 = vld [vmem:[#allocation2 + $0x48] sm:$0xff]
      %v1685 = vld [vmem:[#allocation2 + $0x50] sm:$0xff]
      %v1686 = vld [vmem:[#allocation2 + $0x58] sm:$0xff]
      %v1687 = vld [vmem:[#allocation2 + $0x60] sm:$0xff]
      %v1688 = vld [vmem:[#allocation2 + $0x68] sm:$0xff]
      %v1689 = vld [vmem:[#allocation2 + $0x70] sm:$0xff]
      %v1690 = vld [vmem:[#allocation2 + $0x78] sm:$0xff]
      %v1691 = vld [vmem:[%s4] sm:$0x1]
      %v1693 = vperm.slane %v1691, 0
      %v1695 = vadd.f32 %v1675, %v1693
      %v1696 = vadd.f32 %v1676, %v1693
      %v1697 = vadd.f32 %v1677, %v1693
      %v1698 = vadd.f32 %v1678, %v1693
      %v1699 = vadd.f32 %v1679, %v1693
      %v1700 = vadd.f32 %v1680, %v1693
      %v1701 = vadd.f32 %v1681, %v1693
      %v1702 = vadd.f32 %v1682, %v1693
      %v1703 = vadd.f32 %v1683, %v1693
      %v1704 = vadd.f32 %v1684, %v1693
      %v1705 = vadd.f32 %v1685, %v1693
      %v1706 = vadd.f32 %v1686, %v1693
      %v1707 = vadd.f32 %v1687, %v1693
      %v1708 = vadd.f32 %v1688, %v1693
      %v1709 = vadd.f32 %v1689, %v1693
      %v1710 = vadd.f32 %v1690, %v1693
      %1711 = vst [vmem:[#allocation11] sm:$0xff] %v1695
      %1712 = vst [vmem:[#allocation11 + $0x8] sm:$0xff] %v1696
      %1713 = vst [vmem:[#allocation11 + $0x10] sm:$0xff] %v1697
      %1714 = vst [vmem:[#allocation11 + $0x18] sm:$0xff] %v1698
      %1715 = vst [vmem:[#allocation11 + $0x20] sm:$0xff] %v1699
      %1716 = vst [vmem:[#allocation11 + $0x28] sm:$0xff] %v1700
      %1717 = vst [vmem:[#allocation11 + $0x30] sm:$0xff] %v1701
      %1718 = vst [vmem:[#allocation11 + $0x38] sm:$0xff] %v1702
      %1719 = vst [vmem:[#allocation11 + $0x40] sm:$0xff] %v1703
      %1720 = vst [vmem:[#allocation11 + $0x48] sm:$0xff] %v1704
      %1721 = vst [vmem:[#allocation11 + $0x50] sm:$0xff] %v1705
      %1722 = vst [vmem:[#allocation11 + $0x58] sm:$0xff] %v1706
      %1723 = vst [vmem:[#allocation11 + $0x60] sm:$0xff] %v1707
      %1724 = vst [vmem:[#allocation11 + $0x68] sm:$0xff] %v1708
      %1725 = vst [vmem:[#allocation11 + $0x70] sm:$0xff] %v1709
      %1726 = vst [vmem:[#allocation11 + $0x78] sm:$0xff] %v1710
    $region45: #{tpu_custom_call.1} parent=1 // pred_fallthru
      _
    // Predicated region
    $region46: #{tpu_custom_call.1} parent=1 // pred_check
      _
    $region47: #{tpu_custom_call.1} parent=1 // pred_check_branch
      %1728 = sbr.rel (0) target = $region49
    $region48: #{tpu_custom_call.1} parent=1 // pred_region
      %1730 = vsyncadd [#allocation5], 0
      %s1731 = sshll.u32 [#allocation11], 4
      %s1732 = int_to_ptr.vmem [resolvable:$true] %s1731
      %s1733 = sshll.u32 %s5, 4
      %s1734 = int_to_ptr.hbm [resolvable:$true] %s1733
      %1739 = dma.vmem_to_hbm [thread:$0]  %s1732, 2048, %s1734, [#allocation5], 128, 128, 8
    $region49: #{tpu_custom_call.1} parent=1 // pred_fallthru
      _
    // Predicated region
    $region50: #{tpu_custom_call.1} parent=1 // pred_check
      _
    $region51: #{tpu_custom_call.1} parent=1 // pred_check_branch
      %1741 = sbr.rel (0) target = $region53
    $region52: #{tpu_custom_call.1} parent=1 // pred_region
      %1743 = dma.done [#allocation5], 2048
    $region53: #{tpu_custom_call.1} parent=1 // pred_fallthru
      _
    %1744 = vsyncpa [#allocation4], 1
    %1745 = vsyncpa [#allocation7], 1
    %1746 = vsyncpa [#allocation10], 1
    %1747 = vsyncpa [#allocation5], 1

</llo_original>
